<compile_context>
chip_gen: v7x
topology: tpu7x:2x2x1
jax: 0.10.0
libtpu: 0.0.40
codegen_flags: <defaults>
</compile_context>

<pallas_src>
import math

import jax
import jax.numpy as jnp
from jax.experimental import pallas as pl
from jax.experimental.pallas import tpu as pltpu


# ----------------------------------------------------------------------------
# Tiling configuration
# ----------------------------------------------------------------------------
BM_CAP = 256          # rows per output tile (M <= 256 for batch=1, 16x16)
BN_CAP = 2560         # lane-dense output tiles
BK_CAP = 3072         # contraction tile
VMEM_LIMIT = 32 * 1024 * 1024   # safe on v5e/v6e (128 MiB) and v7x (64 MiB)


def _ceil_to(x, m):
    return (x + m - 1) // m * m


def _split(d, cap, align):
    """Return (block, padded_total): block*n == padded_total >= d, block % align == 0."""
    dp = _ceil_to(d, align)
    n = max(1, -(-dp // cap))
    blk = _ceil_to(-(-dp // n), align)
    return blk, blk * n


# ----------------------------------------------------------------------------
# Pallas matmul (bf16 operands, f32 accumulation, fused bias/residual epilogue)
# ----------------------------------------------------------------------------
def _mm_kernel(a_ref, w_ref, b_ref, o_ref, acc_ref):
    @pl.when(pl.program_id(2) == 0)
    def _():
        acc_ref[...] = jnp.zeros_like(acc_ref)

    acc_ref[...] += jnp.dot(a_ref[...], w_ref[...],
                            preferred_element_type=jnp.float32)

    @pl.when(pl.program_id(2) == pl.num_programs(2) - 1)
    def _():
        o_ref[...] = (acc_ref[...] + b_ref[...]).astype(o_ref.dtype)


def _mm_res_kernel(a_ref, w_ref, b_ref, r_ref, o_ref, acc_ref):
    @pl.when(pl.program_id(2) == 0)
    def _():
        acc_ref[...] = jnp.zeros_like(acc_ref)

    acc_ref[...] += jnp.dot(a_ref[...], w_ref[...],
                            preferred_element_type=jnp.float32)

    @pl.when(pl.program_id(2) == pl.num_programs(2) - 1)
    def _():
        o_ref[...] = (acc_ref[...] + b_ref[...] + r_ref[...]).astype(o_ref.dtype)


_MM_CACHE = {}


def _get_matmul_call(Mp, Kp, Np, bm, bk, bn, with_res):
    key = (Mp, Kp, Np, bm, bk, bn, with_res)
    fn = _MM_CACHE.get(key)
    if fn is None:
        in_specs = [pl.BlockSpec((bm, bk), lambda i, j, k: (i, k)),
                    pl.BlockSpec((bk, bn), lambda i, j, k: (k, j)),
                    pl.BlockSpec((1, bn), lambda i, j, k: (0, j))]
        kernel = _mm_kernel
        if with_res:
            in_specs = in_specs + [pl.BlockSpec((bm, bn), lambda i, j, k: (i, j))]
            kernel = _mm_res_kernel
        call = pl.pallas_call(
            kernel,
            out_shape=jax.ShapeDtypeStruct((Mp, Np), jnp.float32),
            grid_spec=pltpu.PrefetchScalarGridSpec(
                num_scalar_prefetch=0,
                grid=(Mp // bm, Np // bn, Kp // bk),
                in_specs=in_specs,
                out_specs=pl.BlockSpec((bm, bn), lambda i, j, k: (i, j)),
                scratch_shapes=[pltpu.VMEM((bm, bn), jnp.float32)]),
            compiler_params=pltpu.CompilerParams(
                dimension_semantics=("parallel", "parallel", "arbitrary"),
                vmem_limit_bytes=VMEM_LIMIT))
        fn = jax.jit(call)
        _MM_CACHE[key] = fn
    return fn


def prep_matmul_weight(w, b=None):
    """Pad weight to the MXU block grid and cast to bf16 ONCE at build time."""
    K, N = w.shape
    bk, Kp = _split(K, BK_CAP, 128)
    bn, Np = _split(N, BN_CAP, 128)
    w_p = jnp.pad(w.astype(jnp.float32),
                  ((0, Kp - K), (0, Np - N))).astype(jnp.bfloat16)
    bv = jnp.zeros((N,), jnp.float32) if b is None else b.astype(jnp.float32)
    b_p = jnp.pad(bv, ((0, Np - N),)).reshape(1, Np)
    return {'w': w_p, 'b': b_p, 'K': K, 'N': N, 'Kp': Kp, 'Np': Np,
            'bk': bk, 'bn': bn}


def pallas_matmul(a, wp, row_bias=None, residual=None):
    """(M,K) f32 @ prepped bf16 weight, f32 accumulation.
    Fused epilogue: + bias (+ optional (1,N) row_bias) (+ optional (M,N) residual)."""
    M, K = a.shape
    assert K == wp['K'], (K, wp['K'])
    N, Kp, Np, bk, bn = wp['N'], wp['Kp'], wp['Np'], wp['bk'], wp['bn']
    bm, Mp = _split(M, BM_CAP, 8)
    a_p = a.astype(jnp.bfloat16)
    if Mp - M or Kp - K:
        a_p = jnp.pad(a_p, ((0, Mp - M), (0, Kp - K)))
    bias = wp['b']
    if row_bias is not None:
        rb = row_bias.reshape(1, N).astype(jnp.float32)
        if Np - N:
            rb = jnp.pad(rb, ((0, 0), (0, Np - N)))
        bias = bias + rb
    args = [a_p, wp['w'], bias]
    if residual is not None:
        r = residual.astype(jnp.float32)
        if Mp - M or Np - N:
            r = jnp.pad(r, ((0, Mp - M), (0, Np - N)))
        args.append(r)
    out = _get_matmul_call(Mp, Kp, Np, bm, bk, bn, residual is not None)(*args)
    if Mp - M or Np - N:
        out = out[:M, :N]
    return out


# ----------------------------------------------------------------------------
# GroupNorm (lane-dense, one grid step per batch, optional fused SiLU)
# ----------------------------------------------------------------------------
_GN_CACHE = {}
_GN_ONEHOT = {}


def _get_group_onehots(C, G):
    key = (C, G)
    v = _GN_ONEHOT.get(key)
    if v is None:
        Gp = _ceil_to(G, 128)
        gids = jnp.arange(C, dtype=jnp.int32) // (C // G)
        oh_cg = (gids[:, None] == jnp.arange(Gp, dtype=jnp.int32)[None, :]
                 ).astype(jnp.float32)                       # (C, Gp)
        v = (oh_cg, oh_cg.T)                                 # (C,Gp), (Gp,C)
        _GN_ONEHOT[key] = v
    return v


def _get_groupnorm_call(N, HW, C, G, eps, act):
    key = (N, HW, C, G, eps, act)
    fn = _GN_CACHE.get(key)
    if fn is None:
        Gp = _ceil_to(G, 128)
        inv_cnt = 1.0 / float(HW * (C // G))

        def kernel(x_ref, g_ref, b_ref, cg_ref, gc_ref, o_ref):
            x = x_ref[0].astype(jnp.float32)                           # (HW, C)
            cg = cg_ref[...]                                           # (C, Gp)
            gc = gc_ref[...]                                           # (Gp, C)
            s1 = jnp.dot(x, cg, preferred_element_type=jnp.float32)    # (HW, Gp)
            s2 = jnp.dot(x * x, cg, preferred_element_type=jnp.float32)
            mean_g = jnp.sum(s1, axis=0, keepdims=True) * inv_cnt      # (1, Gp)
            ex2_g = jnp.sum(s2, axis=0, keepdims=True) * inv_cnt
            inv_g = jax.lax.rsqrt(ex2_g - mean_g * mean_g + eps)
            mean_c = jnp.dot(mean_g, gc, preferred_element_type=jnp.float32)
            inv_c = jnp.dot(inv_g, gc, preferred_element_type=jnp.float32)
            y = (x - mean_c) * inv_c * g_ref[...] + b_ref[...]
            if act:
                y = y * jax.nn.sigmoid(y)                              # fused SiLU
            o_ref[0] = y.astype(o_ref.dtype)

        call = pl.pallas_call(
            kernel,
            out_shape=jax.ShapeDtypeStruct((N, HW, C), jnp.float32),
            grid=(N,),
            in_specs=[pl.BlockSpec((1, HW, C), lambda i: (i, 0, 0)),
                      pl.BlockSpec((1, C), lambda i: (0, 0)),
                      pl.BlockSpec((1, C), lambda i: (0, 0)),
                      pl.BlockSpec((C, Gp), lambda i: (0, 0)),
                      pl.BlockSpec((Gp, C), lambda i: (0, 0))],
            out_specs=pl.BlockSpec((1, HW, C), lambda i: (i, 0, 0)),
            compiler_params=pltpu.CompilerParams(
                dimension_semantics=("parallel",),
                vmem_limit_bytes=VMEM_LIMIT))
        fn = jax.jit(call)
        _GN_CACHE[key] = fn
    return fn


def pallas_group_norm(x, p, eps, act, groups=32):
    N, H, W, C = x.shape
    HW = H * W
    oh_cg, oh_gc = _get_group_onehots(C, groups)
    fn = _get_groupnorm_call(N, HW, C, groups, float(eps), bool(act))
    out = fn(x.reshape(N, HW, C), p['g'], p['b'], oh_cg, oh_gc)
    return out.reshape(N, H, W, C)


# ----------------------------------------------------------------------------
# LayerNorm
# ----------------------------------------------------------------------------
_LN_CACHE = {}


def _get_layernorm_call(R, D, eps, rb):
    key = (R, D, eps, rb)
    fn = _LN_CACHE.get(key)
    if fn is None:
        def kernel(x_ref, g_ref, b_ref, o_ref):
            xv = x_ref[...].astype(jnp.float32)
            mean = jnp.mean(xv, axis=-1, keepdims=True)
            var = jnp.mean(jnp.square(xv - mean), axis=-1, keepdims=True)
            y = (xv - mean) * jax.lax.rsqrt(var + eps)
            o_ref[...] = (y * g_ref[...] + b_ref[...]).astype(o_ref.dtype)

        call = pl.pallas_call(
            kernel,
            out_shape=jax.ShapeDtypeStruct((R, D), jnp.float32),
            grid=(R // rb,),
            in_specs=[pl.BlockSpec((rb, D), lambda i: (i, 0)),
                      pl.BlockSpec((1, D), lambda i: (0, 0)),
                      pl.BlockSpec((1, D), lambda i: (0, 0))],
            out_specs=pl.BlockSpec((rb, D), lambda i: (i, 0)),
            compiler_params=pltpu.CompilerParams(
                dimension_semantics=("parallel",),
                vmem_limit_bytes=VMEM_LIMIT))
        fn = jax.jit(call)
        _LN_CACHE[key] = fn
    return fn


def pallas_layer_norm(x2d, p, eps):
    R, D = x2d.shape
    rb = 256 if (R > 256 and R % 256 == 0) else R   # row-tiled pipeline when useful
    return _get_layernorm_call(R, D, float(eps), rb)(x2d, p['g'], p['b'])


# ----------------------------------------------------------------------------
# Attention: softmax(q k^T * scale) v, all heads per batch in one grid step
# ----------------------------------------------------------------------------
_ATTN_CACHE = {}


def _get_attention_call(B, Hh, T, Tkp, Dp, scale):
    key = (B, Hh, T, Tkp, Dp, scale)
    fn = _ATTN_CACHE.get(key)
    if fn is None:
        def kernel(q_ref, k_ref, v_ref, m_ref, o_ref):
            q = q_ref[0]                                      # (Hh, T, Dp) bf16
            k = k_ref[0]                                      # (Hh, Tkp, Dp)
            v = v_ref[0]
            s = jnp.einsum('htd,hkd->htk', q, k,
                           preferred_element_type=jnp.float32) * scale
            s = s + m_ref[0]                                  # -inf on padded keys
            mx = jnp.max(s, axis=-1, keepdims=True)
            e = jnp.exp(s - mx)
            denom = jnp.sum(e, axis=-1, keepdims=True)
            pr = e * pl.reciprocal(denom, approx=True)        # EUP reciprocal
            o = jnp.einsum('htk,hkd->htd', pr.astype(v.dtype), v,
                           preferred_element_type=jnp.float32)
            o_ref[0] = o.astype(o_ref.dtype)

        call = pl.pallas_call(
            kernel,
            out_shape=jax.ShapeDtypeStruct((B, Hh, T, Dp), jnp.float32),
            grid=(B,),
            in_specs=[pl.BlockSpec((1, Hh, T, Dp), lambda i: (i, 0, 0, 0)),
                      pl.BlockSpec((1, Hh, Tkp, Dp), lambda i: (i, 0, 0, 0)),
                      pl.BlockSpec((1, Hh, Tkp, Dp), lambda i: (i, 0, 0, 0)),
                      pl.BlockSpec((1, 1, 1, Tkp), lambda i: (0, 0, 0, 0))],
            out_specs=pl.BlockSpec((1, Hh, T, Dp), lambda i: (i, 0, 0, 0)),
            compiler_params=pltpu.CompilerParams(
                dimension_semantics=("parallel",),
                vmem_limit_bytes=VMEM_LIMIT))
        fn = jax.jit(call)
        _ATTN_CACHE[key] = fn
    return fn


def pallas_attention(q, k, v, scale):
    B, Hh, T, Dh = q.shape
    Tk = k.shape[2]
    Dp = _ceil_to(Dh, 128)
    Tkp = _ceil_to(Tk, 128)
    qp = jnp.pad(q, ((0, 0), (0, 0), (0, 0), (0, Dp - Dh))).astype(jnp.bfloat16)
    kp = jnp.pad(k, ((0, 0), (0, 0), (0, Tkp - Tk), (0, Dp - Dh))).astype(jnp.bfloat16)
    vp = jnp.pad(v, ((0, 0), (0, 0), (0, Tkp - Tk), (0, Dp - Dh))).astype(jnp.bfloat16)
    mask = jnp.where(jnp.arange(Tkp) < Tk, 0.0, -1e30).astype(jnp.float32)
    mask = mask.reshape(1, 1, 1, Tkp)
    out = _get_attention_call(B, Hh, T, Tkp, Dp, float(scale))(qp, kp, vp, mask)
    return out[..., :Dh]


# ----------------------------------------------------------------------------
# Conv / linear glue (im2col + Pallas matmul)
# ----------------------------------------------------------------------------
def silu(x):
    return x * jax.nn.sigmoid(x)


def conv3x3(x, wp, stride=1, row_bias=None, residual=None):
    """3x3 conv, padding=1, NHWC, via im2col + Pallas matmul with fused epilogue."""
    # TODO(synk): im2col patches are materialized in HBM; fusing the 9 taps
    # into the matmul K loop would cut activation traffic further.
    N, H, W, C = x.shape
    Hout = (H + 2 - 3) // stride + 1
    Wout = (W + 2 - 3) // stride + 1
    xp = jnp.pad(x, ((0, 0), (1, 1), (1, 1), (0, 0)))
    cols = []
    for dy in range(3):
        for dx in range(3):
            cols.append(xp[:, dy: dy + stride * (Hout - 1) + 1: stride,
                              dx: dx + stride * (Wout - 1) + 1: stride, :])
    patches = jnp.concatenate(cols, axis=-1).reshape(N * Hout * Wout, 9 * C)
    res2d = None if residual is None else residual.reshape(N * Hout * Wout, -1)
    out = pallas_matmul(patches, wp, row_bias=row_bias, residual=res2d)
    return out.reshape(N, Hout, Wout, -1)


def conv1x1(x, wp, residual=None):
    N, H, W, C = x.shape
    res2d = None if residual is None else residual.reshape(N * H * W, -1)
    out = pallas_matmul(x.reshape(N * H * W, C), wp, residual=res2d)
    return out.reshape(N, H, W, -1)


# ----------------------------------------------------------------------------
# Deterministic parameter construction (shapes from the PyTorch __init__)
# ----------------------------------------------------------------------------
class ParamGen:
    def __init__(self, seed=0):
        self.key = jax.random.PRNGKey(seed)
        self.count = 0

    def normal(self, shape, std=0.02):
        self.count += 1
        k = jax.random.fold_in(self.key, self.count)
        return std * jax.random.normal(k, shape, dtype=jnp.float32)


PG = ParamGen(0)


def conv3x3_params(cin, cout):
    w = PG.normal((3, 3, cin, cout)).reshape(9 * cin, cout)
    return prep_matmul_weight(w, jnp.zeros((cout,), jnp.float32))


def conv1x1_params(cin, cout):
    return prep_matmul_weight(PG.normal((cin, cout)), jnp.zeros((cout,), jnp.float32))


def linear_params(fin, fout, bias=True):
    b = jnp.zeros((fout,), jnp.float32) if bias else None
    return prep_matmul_weight(PG.normal((fin, fout)), b)


def norm_params(c):
    return {'g': jnp.ones((1, c), jnp.float32), 'b': jnp.zeros((1, c), jnp.float32)}


def resnet_params(cin, cout, shortcut):
    p = {'norm1': norm_params(cin),
         'conv1': conv3x3_params(cin, cout),
         'temb': linear_params(1280, cout),
         'norm2': norm_params(cout),
         'conv2': conv3x3_params(cout, cout)}
    if shortcut:
        p['shortcut'] = conv1x1_params(cin, cout)
    return p


def attention_params(inner, cross=None):
    if cross is None:
        wq = PG.normal((inner, inner))
        wk = PG.normal((inner, inner))
        wv = PG.normal((inner, inner))
        p = {'qkv': prep_matmul_weight(jnp.concatenate([wq, wk, wv], axis=1))}
    else:
        wq = PG.normal((inner, inner))
        wk = PG.normal((cross, inner))
        wv = PG.normal((cross, inner))
        p = {'q': prep_matmul_weight(wq),
             'kv': prep_matmul_weight(jnp.concatenate([wk, wv], axis=1))}
    p['o'] = linear_params(inner, inner)
    return p


def basic_block_params(h):
    return {'ln1': norm_params(h), 'attn1': attention_params(h),
            'ln2': norm_params(h), 'attn2': attention_params(h, 768),
            'ln3': norm_params(h),
            'ff': {'proj': linear_params(h, 8 * h),
                   'out': linear_params(4 * h, h)}}


def transformer2d_params(cin, cout, n_layers):
    return {'norm': norm_params(cin),
            'proj_in': conv1x1_params(cin, cout),
            'blocks': [basic_block_params(cout) for _ in range(n_layers)],
            'proj_out': conv1x1_params(cout, cout)}


def cross_down_params(cin, cout, shortcut0):
    return {'res': [resnet_params(cin, cout, shortcut0),
                    resnet_params(cout, cout, False)],
            'attn': [transformer2d_params(cout, cout, 1),
                     transformer2d_params(cout, cout, 1)],
            'down': conv3x3_params(cout, cout)}


def cross_up_params(cin, cout, prev, has_up):
    p = {'res': [resnet_params(prev + cout, cout, True),
                 resnet_params(2 * cout, cout, True),
                 resnet_params(cout + cin, cout, True)],
         'attn': [transformer2d_params(cout, cout, 1) for _ in range(3)]}
    if has_up:
        p['upsample'] = conv3x3_params(cout, cout)
    return p


def build_unet_params():
    P = {}
    P['conv_in'] = conv3x3_params(4, 320)
    P['time_embedding'] = {'l1': linear_params(320, 1280),
                           'l2': linear_params(1280, 1280)}
    P['down0'] = cross_down_params(320, 320, False)
    P['down1'] = cross_down_params(320, 640, True)
    P['down2'] = cross_down_params(640, 1280, True)
    P['down3'] = {'res': [resnet_params(1280, 1280, False),
                          resnet_params(1280, 1280, False)]}
    P['mid'] = {'res': [resnet_params(1280, 1280, False),
                        resnet_params(1280, 1280, False)],
                'attn': [transformer2d_params(1280, 1280, 1)]}
    P['up0'] = {'res': [resnet_params(1280 + 1280, 1280, True),
                        resnet_params(2 * 1280, 1280, True),
                        resnet_params(1280 + 1280, 1280, True)],
                'upsample': conv3x3_params(1280, 1280)}
    P['up1'] = cross_up_params(640, 1280, 1280, True)
    P['up2'] = cross_up_params(320, 640, 1280, True)
    P['up3'] = cross_up_params(320, 320, 640, False)
    P['conv_norm_out'] = norm_params(320)
    P['conv_out'] = conv3x3_params(320, 4)
    return P


# ----------------------------------------------------------------------------
# Forward pass (NHWC internally)
# ----------------------------------------------------------------------------
def timestep_sincos(ts, dim=320):
    half = dim // 2
    exponent = -math.log(10000.0) * jnp.arange(half, dtype=jnp.float32) / half
    freqs = jnp.exp(exponent)
    args = ts[:, None].astype(jnp.float32) * freqs[None, :]
    return jnp.concatenate([jnp.cos(args), jnp.sin(args)], axis=-1)


def resnet_forward(p, x, emb_act):
    B = x.shape[0]
    h = pallas_group_norm(x, p['norm1'], 1e-5, act=True)          # GN + fused SiLU
    t = pallas_matmul(emb_act, p['temb'])                         # (B, Cout)
    if B == 1:
        h = conv3x3(h, p['conv1'], row_bias=t)                    # temb fused into bias
    else:
        h = conv3x3(h, p['conv1'])
        h = h + t[:, None, None, :]
    h = pallas_group_norm(h, p['norm2'], 1e-5, act=True)
    shortcut = conv1x1(x, p['shortcut']) if 'shortcut' in p else x
    return conv3x3(h, p['conv2'], residual=shortcut)              # residual fused


def attention_forward(p, x, enc=None, num_heads=8, residual2d=None):
    B, T, C = x.shape
    x2d = x.reshape(B * T, C)
    if enc is None:
        qkv = pallas_matmul(x2d, p['qkv'])                        # fused q/k/v
        q, k, v = qkv[:, :C], qkv[:, C:2 * C], qkv[:, 2 * C:]
        Tc = T
    else:
        Bc, Tc, Cc = enc.shape
        q = pallas_matmul(x2d, p['q'])
        kv = pallas_matmul(enc.reshape(Bc * Tc, Cc), p['kv'])     # fused k/v
        k, v = kv[:, :C], kv[:, C:]
    Dh = C // num_heads
    q = q.reshape(B, T, num_heads, Dh).transpose(0, 2, 1, 3)
    k = k.reshape(B, Tc, num_heads, Dh).transpose(0, 2, 1, 3)
    v = v.reshape(B, Tc, num_heads, Dh).transpose(0, 2, 1, 3)
    o = pallas_attention(q, k, v, Dh ** -0.5)                     # (B, nH, T, Dh)
    o = o.transpose(0, 2, 1, 3).reshape(B * T, C)
    o = pallas_matmul(o, p['o'], residual=residual2d)             # out-proj + residual
    return o.reshape(B, T, C)


def feed_forward(p, x, residual2d=None):
    B, T, C = x.shape
    h = pallas_matmul(x.reshape(B * T, C), p['proj'])             # (BT, 8C)
    x1, x2 = h[:, :4 * C], h[:, 4 * C:]
    # TODO(synk): exact erf-GELU GEGLU gate kept in plain XLA.
    h = x1 * jax.nn.gelu(x2, approximate=False)
    h = pallas_matmul(h, p['out'], residual=residual2d)           # out-proj + residual
    return h.reshape(B, T, C)


def basic_block_forward(p, x, enc):
    B, T, C = x.shape
    r = x
    h = pallas_layer_norm(x.reshape(B * T, C), p['ln1'], 1e-5).reshape(B, T, C)
    x = attention_forward(p['attn1'], h, residual2d=r.reshape(B * T, C))
    r = x
    h = pallas_layer_norm(x.reshape(B * T, C), p['ln2'], 1e-5).reshape(B, T, C)
    x = attention_forward(p['attn2'], h, enc=enc, residual2d=r.reshape(B * T, C))
    r = x
    h = pallas_layer_norm(x.reshape(B * T, C), p['ln3'], 1e-5).reshape(B, T, C)
    x = feed_forward(p['ff'], h, residual2d=r.reshape(B * T, C))
    return x


def transformer2d_forward(p, x, enc):
    N, H, W, C = x.shape
    res = x
    h = pallas_group_norm(x, p['norm'], 1e-6, act=False)
    h = conv1x1(h, p['proj_in'])
    inner = h.shape[-1]
    h = h.reshape(N, H * W, inner)
    for bp in p['blocks']:
        h = basic_block_forward(bp, h, enc)
    h = h.reshape(N, H, W, inner)
    return conv1x1(h, p['proj_out'], residual=res)                # residual fused


def cross_down_forward(p, x, emb_act, enc):
    outs = []
    for rp, ap in zip(p['res'], p['attn']):
        x = resnet_forward(rp, x, emb_act)
        x = transformer2d_forward(ap, x, enc)
        outs.append(x)
    x = conv3x3(x, p['down'], stride=2)
    outs.append(x)
    return x, outs


def down_block_forward(p, x, emb_act):
    outs = []
    for rp in p['res']:
        x = resnet_forward(rp, x, emb_act)
        outs.append(x)
    return x, outs


def mid_forward(p, x, emb_act, enc):
    x = resnet_forward(p['res'][0], x, emb_act)
    x = transformer2d_forward(p['attn'][0], x, enc)
    x = resnet_forward(p['res'][1], x, emb_act)
    return x


def upsample_forward(wp, x):
    x = jnp.repeat(jnp.repeat(x, 2, axis=1), 2, axis=2)           # nearest x2
    return conv3x3(x, wp)


def up_block_forward(p, x, skips, emb_act):
    # TODO(synk): skip concat is materialized; could be split into two
    # accumulating K-ranges of the first conv instead.
    skips = list(skips)
    for rp in p['res']:
        r = skips.pop()
        x = jnp.concatenate([x, r], axis=-1)
        x = resnet_forward(rp, x, emb_act)
    return upsample_forward(p['upsample'], x)


def cross_up_forward(p, x, skips, emb_act, enc):
    skips = list(skips)
    for rp, ap in zip(p['res'], p['attn']):
        r = skips.pop()
        x = jnp.concatenate([x, r], axis=-1)
        x = resnet_forward(rp, x, emb_act)
        x = transformer2d_forward(ap, x, enc)
    if 'upsample' in p:
        x = upsample_forward(p['upsample'], x)
    return x


def unet_forward(P, sample_nchw, timesteps, enc):
    x = jnp.transpose(sample_nchw, (0, 2, 3, 1))                  # NCHW -> NHWC
    B = x.shape[0]
    ts = jnp.broadcast_to(timesteps.astype(jnp.float32), (B,))
    t_emb = timestep_sincos(ts, 320)
    emb = pallas_matmul(t_emb, P['time_embedding']['l1'])
    emb = silu(emb)
    emb = pallas_matmul(emb, P['time_embedding']['l2'])
    emb_act = silu(emb)                                           # shared by all resnets

    x = conv3x3(x, P['conv_in'])
    s0 = x
    x, (s1, s2, s3) = cross_down_forward(P['down0'], x, emb_act, enc)
    x, (s4, s5, s6) = cross_down_forward(P['down1'], x, emb_act, enc)
    x, (s7, s8, s9) = cross_down_forward(P['down2'], x, emb_act, enc)
    x, (s10, s11) = down_block_forward(P['down3'], x, emb_act)

    x = mid_forward(P['mid'], x, emb_act, enc)

    x = up_block_forward(P['up0'], x, [s9, s10, s11], emb_act)
    x = cross_up_forward(P['up1'], x, [s6, s7, s8], emb_act, enc)
    x = cross_up_forward(P['up2'], x, [s3, s4, s5], emb_act, enc)
    x = cross_up_forward(P['up3'], x, [s0, s1, s2], emb_act, enc)

    x = pallas_group_norm(x, P['conv_norm_out'], 1e-5, act=True)  # norm + SiLU
    x = conv3x3(x, P['conv_out'])
    return [jnp.transpose(x, (0, 3, 1, 2))]                       # back to NCHW


# ----------------------------------------------------------------------------
if __name__ == "__main__":
    key = jax.random.PRNGKey(0)
    B, H, W = 1, 16, 16
    sample = jax.random.normal(jax.random.fold_in(key, 1), (B, 4, H, W), jnp.float32)
    timesteps = jnp.array([7.0], dtype=jnp.float32)
    encoder_hidden_states = jax.random.normal(jax.random.fold_in(key, 2),
                                              (B, 8, 768), jnp.float32)

    params = build_unet_params()
    out = unet_forward(params, sample, timesteps, encoder_hidden_states)[0]
    jax.block_until_ready(out)
    assert out.shape == (B, 4, H, W)
    print("KERNEL_OK")
</pallas_src>

<mosaic_0001>
module attributes {stable_mosaic.version = 11 : i64} {
  func.func @_mm_kernel(%arg0: i32, %arg1: i32, %arg2: i32, %arg3: memref<8x384xbf16, #tpu.memory_space<vmem>>, %arg4: memref<384x1280xbf16, #tpu.memory_space<vmem>>, %arg5: memref<1x1280xf32, #tpu.memory_space<vmem>>, %arg6: memref<8x1280xf32, #tpu.memory_space<vmem>>, %arg7: memref<8x1280xf32, #tpu.memory_space<vmem>>) attributes {dimension_semantics = [#tpu.dimension_semantics<parallel>, #tpu.dimension_semantics<parallel>, #tpu.dimension_semantics<arbitrary>], iteration_bounds = array<i64: 1, 1, 1>, scalar_prefetch = 0 : i64, scratch_operands = 1 : i64, tpu.core_type = #tpu.core_type<tc>, window_params = [{transform_indices = @transform_0, window_bounds = array<i64: 8, 384>}, {transform_indices = @transform_1, window_bounds = array<i64: 384, 1280>}, {transform_indices = @transform_2, window_bounds = array<i64: 1, 1280>}, {transform_indices = @transform_3, window_bounds = array<i64: 8, 1280>}]} {
    %c0_i32 = arith.constant 0 : i32
    %0 = arith.cmpi eq, %arg2, %c0_i32 : i32
    %1 = arith.extui %0 : i1 to i32
    %c0_i32_0 = arith.constant 0 : i32
    %2 = arith.cmpi ne, %1, %c0_i32_0 : i32
    scf.if %2 {
      %cst_10 = arith.constant 0.000000e+00 : f32
      %12 = vector.broadcast %cst_10 : f32 to vector<8x1280xf32>
      %c0_11 = arith.constant 0 : index
      %c0_12 = arith.constant 0 : index
      %13 = vector.load %arg7[%c0_11, %c0_12] : memref<8x1280xf32, #tpu.memory_space<vmem>>, vector<8x1280xf32>
      tpu.vector_store %arg7[%c0_11, %c0_12], %12 {strides = array<i32>} : memref<8x1280xf32, #tpu.memory_space<vmem>>, vector<8x1280xf32>,
    } else {
    }
    %c0 = arith.constant 0 : index
    %c0_1 = arith.constant 0 : index
    %3 = vector.load %arg7[%c0, %c0_1] : memref<8x1280xf32, #tpu.memory_space<vmem>>, vector<8x1280xf32>
    %c0_2 = arith.constant 0 : index
    %c0_3 = arith.constant 0 : index
    %4 = vector.load %arg3[%c0_2, %c0_3] : memref<8x384xbf16, #tpu.memory_space<vmem>>, vector<8x384xbf16>
    %c0_4 = arith.constant 0 : index
    %c0_5 = arith.constant 0 : index
    %5 = vector.load %arg4[%c0_4, %c0_5] : memref<384x1280xbf16, #tpu.memory_space<vmem>>, vector<384x1280xbf16>
    %cst = arith.constant dense<0.000000e+00> : vector<8x1280xf32>
    %6 = tpu.matmul %4, %5, %cst {dimension_numbers = #tpu.dot_dimension_numbers<[1], [0], [0], [1], [0, 0, 1, 1], [], []>} : vector<8x384xbf16>, vector<384x1280xbf16>, vector<8x1280xf32> -> vector<8x1280xf32>
    %7 = arith.addf %3, %6 : vector<8x1280xf32>
    %c0_6 = arith.constant 0 : index
    %c0_7 = arith.constant 0 : index
    %8 = vector.load %arg7[%c0_6, %c0_7] : memref<8x1280xf32, #tpu.memory_space<vmem>>, vector<8x1280xf32>
    tpu.vector_store %arg7[%c0_6, %c0_7], %7 {strides = array<i32>} : memref<8x1280xf32, #tpu.memory_space<vmem>>, vector<8x1280xf32>,
    %c0_i32_8 = arith.constant 0 : i32
    %9 = arith.cmpi eq, %arg2, %c0_i32_8 : i32
    %10 = arith.extui %9 : i1 to i32
    %c0_i32_9 = arith.constant 0 : i32
    %11 = arith.cmpi ne, %10, %c0_i32_9 : i32
    scf.if %11 {
      %c0_10 = arith.constant 0 : index
      %c0_11 = arith.constant 0 : index
      %12 = vector.load %arg7[%c0_10, %c0_11] : memref<8x1280xf32, #tpu.memory_space<vmem>>, vector<8x1280xf32>
      %c0_12 = arith.constant 0 : index
      %c0_13 = arith.constant 0 : index
      %13 = vector.load %arg5[%c0_12, %c0_13] : memref<1x1280xf32, #tpu.memory_space<vmem>>, vector<1x1280xf32>
      %14 = vector.broadcast %13 : vector<1x1280xf32> to vector<8x1280xf32>
      %15 = arith.addf %12, %14 : vector<8x1280xf32>
      %c0_14 = arith.constant 0 : index
      %c0_15 = arith.constant 0 : index
      %16 = vector.load %arg6[%c0_14, %c0_15] : memref<8x1280xf32, #tpu.memory_space<vmem>>, vector<8x1280xf32>
      tpu.vector_store %arg6[%c0_14, %c0_15], %15 {strides = array<i32>} : memref<8x1280xf32, #tpu.memory_space<vmem>>, vector<8x1280xf32>,
    } else {
    }
    return
  }
  func.func @transform_0(%arg0: i32, %arg1: i32, %arg2: i32) -> (i32, i32) {
    %c0_i32 = arith.constant 0 : i32
    return %arg0, %arg2 : i32, i32
  }
  func.func @transform_1(%arg0: i32, %arg1: i32, %arg2: i32) -> (i32, i32) {
    %c0_i32 = arith.constant 0 : i32
    return %arg2, %arg1 : i32, i32
  }
  func.func @transform_2(%arg0: i32, %arg1: i32, %arg2: i32) -> (i32, i32) {
    %c0_i32 = arith.constant 0 : i32
    %c0_i32_0 = arith.constant 0 : i32
    return %c0_i32, %arg1 : i32, i32
  }
  func.func @transform_3(%arg0: i32, %arg1: i32, %arg2: i32) -> (i32, i32) {
    %c0_i32 = arith.constant 0 : i32
    return %arg0, %arg1 : i32, i32
  }
}

</mosaic_0001>

<llo_original>
// kernel: tpu_custom_call.1
$region0: #{tpu_custom_call.1}
  #allocation0 [shape = 'u32[]', space=smem, size = 0x4, offset = 0x4, fixed_abs, tag = 'smem constant byte address 0x4 - core index']
  #allocation1 [shape = 'u32[144,128]{1,0:T(1,128)}', space=vmem, size = 0x12000, scoped, tag = 'internal scratch']
  #allocation2 [shape = 'f32[8,1280]{1,0:T(8,128)}', space=vmem, size = 0xa000, scoped, tag = 'scratch operand']
  %s0 = inlined_call_operand.hbm [shape: bf16[8,384], index: 0, kind: input, shape index: {}]
  %s1 = inlined_call_operand.hbm [shape: bf16[384,1280], index: 1, kind: input, shape index: {}]
  %s2 = inlined_call_operand.hbm [shape: f32[1,1280], index: 2, kind: input, shape index: {}]
  %s3 = inlined_call_operand.hbm [shape: f32[8,1280], index: 3, kind: output, shape index: {}]
  %s4 = sld [smem:[#allocation0]]
  $region42: #{tpu_custom_call.1} parent=0
    _
  %s6 = ssub.s32 1, %s4
  %s7 = scalar_select 0, %s6, %s4
  $region1: #{tpu_custom_call.1} parent=0
    #allocation3 [shape = 'u8[6144]{0}', space=vmem, size = 0x1800, scoped, tag = 'input window, operand 0, single buffered']
    #allocation4 [shape = 's32[1]{0}', space=sflag, size = 0x4, scoped, tag = 'scoped memory for tpu_custom_call.1']
    #allocation5 [shape = 's32[1]{0}', space=sflag, size = 0x4, scoped, tag = 'scoped memory for tpu_custom_call.1']
    #allocation6 [shape = 'u8[983040]{0}', space=vmem, size = 0xf0000, scoped, tag = 'input window, operand 1, single buffered']
    #allocation7 [shape = 's32[1]{0}', space=sflag, size = 0x4, scoped, tag = 'scoped memory for tpu_custom_call.1']
    #allocation8 [shape = 'u8[5120]{0}', space=vmem, size = 0x1400, scoped, tag = 'input window, operand 2, single buffered']
    #allocation9 [shape = 'u8[40960]{0}', space=vmem, size = 0xa000, scoped, tag = 'output window, operand 0, single buffered']
    %8 = vsyncpa [#allocation4], 0
    %9 = vsyncpa [#allocation7], 0
    %10 = vsyncpa [#allocation5], 0
    // Predicated region
    $region2: #{tpu_custom_call.1} parent=1 // pred_check
      _
    $region3: #{tpu_custom_call.1} parent=1 // pred_check_branch
      %12 = sbr.rel (0) target = $region5
    $region4: #{tpu_custom_call.1} parent=1 // pred_region
      %s14 = ssub.s32 192, 192
      %15 = vsyncadd [#allocation4], %s14
      %s17 = sshll.u32 [#allocation3], 4
      %s18 = int_to_ptr.vmem [resolvable:$true] %s17
      %20 = dma.hbm_to_vmem [thread:$0]  %s0, 192, %s18, [#allocation4]
    $region5: #{tpu_custom_call.1} parent=1 // pred_fallthru
      _
    // Predicated region
    $region6: #{tpu_custom_call.1} parent=1 // pred_check
      _
    $region7: #{tpu_custom_call.1} parent=1 // pred_check_branch
      %22 = sbr.rel (0) target = $region9
    $region8: #{tpu_custom_call.1} parent=1 // pred_region
      %s24 = ssub.s32 30720, 30720
      %25 = vsyncadd [#allocation7], %s24
      %s26 = sshll.u32 [#allocation6], 4
      %s27 = int_to_ptr.vmem [resolvable:$true] %s26
      %32 = dma.hbm_to_vmem [thread:$0]  %s1, 30720, %s27, [#allocation7], 640, 640, 40
    $region9: #{tpu_custom_call.1} parent=1 // pred_fallthru
      _
    // Predicated region
    $region10: #{tpu_custom_call.1} parent=1 // pred_check
      _
    $region11: #{tpu_custom_call.1} parent=1 // pred_check_branch
      %34 = sbr.rel (0) target = $region13
    $region12: #{tpu_custom_call.1} parent=1 // pred_region
      %s36 = ssub.s32 160, 160
      %37 = vsyncadd [#allocation7], %s36
      %s39 = sshll.u32 [#allocation8], 4
      %s40 = int_to_ptr.vmem [resolvable:$true] %s39
      %42 = dma.hbm_to_vmem [thread:$0]  %s2, 160, %s40, [#allocation7]
    $region13: #{tpu_custom_call.1} parent=1 // pred_fallthru
      _
    // Predicated region
    $region14: #{tpu_custom_call.1} parent=1 // pred_check
      _
    $region15: #{tpu_custom_call.1} parent=1 // pred_check_branch
      %44 = sbr.rel (0) target = $region17
    $region16: #{tpu_custom_call.1} parent=1 // pred_region
      %45 = dma.done [#allocation4], 192
    $region17: #{tpu_custom_call.1} parent=1 // pred_fallthru
      _
    // Predicated region
    $region18: #{tpu_custom_call.1} parent=1 // pred_check
      _
    $region19: #{tpu_custom_call.1} parent=1 // pred_check_branch
      %47 = sbr.rel (0) target = $region21
    $region20: #{tpu_custom_call.1} parent=1 // pred_region
      %48 = dma.done [#allocation7], 30720
    $region21: #{tpu_custom_call.1} parent=1 // pred_fallthru
      _
    // Predicated region
    $region22: #{tpu_custom_call.1} parent=1 // pred_check
      _
    $region23: #{tpu_custom_call.1} parent=1 // pred_check_branch
      %50 = sbr.rel (0) target = $region25
    $region24: #{tpu_custom_call.1} parent=1 // pred_region
      %51 = dma.done [#allocation7], 160
    $region25: #{tpu_custom_call.1} parent=1 // pred_fallthru
      _
    %p53 = scmp.eq.s32.totalorder 0, 0
    // Predicated region
    $region26: #{tpu_custom_call.1} parent=1 // pred_check
      %p54 = pneg %p53
    $region27: #{tpu_custom_call.1} parent=1 // pred_check_branch
      %56 = sbr.rel (%p54) target = $region29
    $region28: #{tpu_custom_call.1} parent=1 // pred_region
      %57 = vst [vmem:[#allocation2] sm:$0xff] 0.0
      %58 = vst [vmem:[#allocation2 + $0x8] sm:$0xff] 0.0
      %59 = vst [vmem:[#allocation2 + $0x10] sm:$0xff] 0.0
      %60 = vst [vmem:[#allocation2 + $0x18] sm:$0xff] 0.0
      %61 = vst [vmem:[#allocation2 + $0x20] sm:$0xff] 0.0
      %62 = vst [vmem:[#allocation2 + $0x28] sm:$0xff] 0.0
      %63 = vst [vmem:[#allocation2 + $0x30] sm:$0xff] 0.0
      %64 = vst [vmem:[#allocation2 + $0x38] sm:$0xff] 0.0
      %65 = vst [vmem:[#allocation2 + $0x40] sm:$0xff] 0.0
      %66 = vst [vmem:[#allocation2 + $0x48] sm:$0xff] 0.0
    $region29: #{tpu_custom_call.1} parent=1 // pred_fallthru
      _
    %v67 = vld [vmem:[#allocation2] sm:$0xff]
    %v68 = vld [vmem:[#allocation2 + $0x8] sm:$0xff]
    %v69 = vld [vmem:[#allocation2 + $0x10] sm:$0xff]
    %v70 = vld [vmem:[#allocation2 + $0x18] sm:$0xff]
    %v71 = vld [vmem:[#allocation2 + $0x20] sm:$0xff]
    %v72 = vld [vmem:[#allocation2 + $0x28] sm:$0xff]
    %v73 = vld [vmem:[#allocation2 + $0x30] sm:$0xff]
    %v74 = vld [vmem:[#allocation2 + $0x38] sm:$0xff]
    %v75 = vld [vmem:[#allocation2 + $0x40] sm:$0xff]
    %v76 = vld [vmem:[#allocation2 + $0x48] sm:$0xff]
    %v77 = vld [vmem:[#allocation3] sm:$0xff]
    %v78 = vld [vmem:[#allocation3 + $0x8] sm:$0xf]
    %v79 = vld [vmem:[#allocation6] sm:$0xff]
    %v80 = vld [vmem:[#allocation6 + $0x8] sm:$0xff]
    %v81 = vld [vmem:[#allocation6 + $0x10] sm:$0xff]
    %v82 = vld [vmem:[#allocation6 + $0x18] sm:$0xff]
    %v83 = vld [vmem:[#allocation6 + $0x20] sm:$0xff]
    %v84 = vld [vmem:[#allocation6 + $0x28] sm:$0xff]
    %v85 = vld [vmem:[#allocation6 + $0x30] sm:$0xff]
    %v86 = vld [vmem:[#allocation6 + $0x38] sm:$0xff]
    %v87 = vld [vmem:[#allocation6 + $0x40] sm:$0xff]
    %v88 = vld [vmem:[#allocation6 + $0x48] sm:$0xff]
    %v89 = vld [vmem:[#allocation6 + $0x50] sm:$0xff]
    %v90 = vld [vmem:[#allocation6 + $0x58] sm:$0xff]
    %v91 = vld [vmem:[#allocation6 + $0x60] sm:$0xff]
    %v92 = vld [vmem:[#allocation6 + $0x68] sm:$0xff]
    %v93 = vld [vmem:[#allocation6 + $0x70] sm:$0xff]
    %v94 = vld [vmem:[#allocation6 + $0x78] sm:$0xff]
    %v95 = vld [vmem:[#allocation6 + $0x80] sm:$0xff]
    %v96 = vld [vmem:[#allocation6 + $0x88] sm:$0xff]
    %v97 = vld [vmem:[#allocation6 + $0x90] sm:$0xff]
    %v98 = vld [vmem:[#allocation6 + $0x98] sm:$0xff]
    %v99 = vld [vmem:[#allocation6 + $0xa0] sm:$0xff]
    %v100 = vld [vmem:[#allocation6 + $0xa8] sm:$0xff]
    %v101 = vld [vmem:[#allocation6 + $0xb0] sm:$0xff]
    %v102 = vld [vmem:[#allocation6 + $0xb8] sm:$0xff]
    %v103 = vld [vmem:[#allocation6 + $0xc0] sm:$0xff]
    %v104 = vld [vmem:[#allocation6 + $0xc8] sm:$0xff]
    %v105 = vld [vmem:[#allocation6 + $0xd0] sm:$0xff]
    %v106 = vld [vmem:[#allocation6 + $0xd8] sm:$0xff]
    %v107 = vld [vmem:[#allocation6 + $0xe0] sm:$0xff]
    %v108 = vld [vmem:[#allocation6 + $0xe8] sm:$0xff]
    %v109 = vld [vmem:[#allocation6 + $0xf0] sm:$0xff]
    %v110 = vld [vmem:[#allocation6 + $0xf8] sm:$0xff]
    %v111 = vld [vmem:[#allocation6 + $0x100] sm:$0xff]
    %v112 = vld [vmem:[#allocation6 + $0x108] sm:$0xff]
    %v113 = vld [vmem:[#allocation6 + $0x110] sm:$0xff]
    %v114 = vld [vmem:[#allocation6 + $0x118] sm:$0xff]
    %v115 = vld [vmem:[#allocation6 + $0x120] sm:$0xff]
    %v116 = vld [vmem:[#allocation6 + $0x128] sm:$0xff]
    %v117 = vld [vmem:[#allocation6 + $0x130] sm:$0xff]
    %v118 = vld [vmem:[#allocation6 + $0x138] sm:$0xff]
    %v119 = vld [vmem:[#allocation6 + $0x140] sm:$0xff]
    %v120 = vld [vmem:[#allocation6 + $0x148] sm:$0xff]
    %v121 = vld [vmem:[#allocation6 + $0x150] sm:$0xff]
    %v122 = vld [vmem:[#allocation6 + $0x158] sm:$0xff]
    %v123 = vld [vmem:[#allocation6 + $0x160] sm:$0xff]
    %v124 = vld [vmem:[#allocation6 + $0x168] sm:$0xff]
    %v125 = vld [vmem:[#allocation6 + $0x170] sm:$0xff]
    %v126 = vld [vmem:[#allocation6 + $0x178] sm:$0xff]
    %v127 = vld [vmem:[#allocation6 + $0x180] sm:$0xff]
    %v128 = vld [vmem:[#allocation6 + $0x188] sm:$0xff]
    %v129 = vld [vmem:[#allocation6 + $0x190] sm:$0xff]
    %v130 = vld [vmem:[#allocation6 + $0x198] sm:$0xff]
    %v131 = vld [vmem:[#allocation6 + $0x1a0] sm:$0xff]
    %v132 = vld [vmem:[#allocation6 + $0x1a8] sm:$0xff]
    %v133 = vld [vmem:[#allocation6 + $0x1b0] sm:$0xff]
    %v134 = vld [vmem:[#allocation6 + $0x1b8] sm:$0xff]
    %v135 = vld [vmem:[#allocation6 + $0x1c0] sm:$0xff]
    %v136 = vld [vmem:[#allocation6 + $0x1c8] sm:$0xff]
    %v137 = vld [vmem:[#allocation6 + $0x1d0] sm:$0xff]
    %v138 = vld [vmem:[#allocation6 + $0x1d8] sm:$0xff]
    %v139 = vld [vmem:[#allocation6 + $0x1e0] sm:$0xff]
    %v140 = vld [vmem:[#allocation6 + $0x1e8] sm:$0xff]
    %v141 = vld [vmem:[#allocation6 + $0x1f0] sm:$0xff]
    %v142 = vld [vmem:[#allocation6 + $0x1f8] sm:$0xff]
    %v143 = vld [vmem:[#allocation6 + $0x200] sm:$0xff]
    %v144 = vld [vmem:[#allocation6 + $0x208] sm:$0xff]
    %v145 = vld [vmem:[#allocation6 + $0x210] sm:$0xff]
    %v146 = vld [vmem:[#allocation6 + $0x218] sm:$0xff]
    %v147 = vld [vmem:[#allocation6 + $0x220] sm:$0xff]
    %v148 = vld [vmem:[#allocation6 + $0x228] sm:$0xff]
    %v149 = vld [vmem:[#allocation6 + $0x230] sm:$0xff]
    %v150 = vld [vmem:[#allocation6 + $0x238] sm:$0xff]
    %v151 = vld [vmem:[#allocation6 + $0x240] sm:$0xff]
    %v152 = vld [vmem:[#allocation6 + $0x248] sm:$0xff]
    %v153 = vld [vmem:[#allocation6 + $0x250] sm:$0xff]
    %v154 = vld [vmem:[#allocation6 + $0x258] sm:$0xff]
    %v155 = vld [vmem:[#allocation6 + $0x260] sm:$0xff]
    %v156 = vld [vmem:[#allocation6 + $0x268] sm:$0xff]
    %v157 = vld [vmem:[#allocation6 + $0x270] sm:$0xff]
    %v158 = vld [vmem:[#allocation6 + $0x278] sm:$0xff]
    %v159 = vld [vmem:[#allocation6 + $0x280] sm:$0xff]
    %v160 = vld [vmem:[#allocation6 + $0x288] sm:$0xff]
    %v161 = vld [vmem:[#allocation6 + $0x290] sm:$0xff]
    %v162 = vld [vmem:[#allocation6 + $0x298] sm:$0xff]
    %v163 = vld [vmem:[#allocation6 + $0x2a0] sm:$0xff]
    %v164 = vld [vmem:[#allocation6 + $0x2a8] sm:$0xff]
    %v165 = vld [vmem:[#allocation6 + $0x2b0] sm:$0xff]
    %v166 = vld [vmem:[#allocation6 + $0x2b8] sm:$0xff]
    %v167 = vld [vmem:[#allocation6 + $0x2c0] sm:$0xff]
    %v168 = vld [vmem:[#allocation6 + $0x2c8] sm:$0xff]
    %v169 = vld [vmem:[#allocation6 + $0x2d0] sm:$0xff]
    %v170 = vld [vmem:[#allocation6 + $0x2d8] sm:$0xff]
    %v171 = vld [vmem:[#allocation6 + $0x2e0] sm:$0xff]
    %v172 = vld [vmem:[#allocation6 + $0x2e8] sm:$0xff]
    %v173 = vld [vmem:[#allocation6 + $0x2f0] sm:$0xff]
    %v174 = vld [vmem:[#allocation6 + $0x2f8] sm:$0xff]
    %v175 = vld [vmem:[#allocation6 + $0x300] sm:$0xff]
    %v176 = vld [vmem:[#allocation6 + $0x308] sm:$0xff]
    %v177 = vld [vmem:[#allocation6 + $0x310] sm:$0xff]
    %v178 = vld [vmem:[#allocation6 + $0x318] sm:$0xff]
    %v179 = vld [vmem:[#allocation6 + $0x320] sm:$0xff]
    %v180 = vld [vmem:[#allocation6 + $0x328] sm:$0xff]
    %v181 = vld [vmem:[#allocation6 + $0x330] sm:$0xff]
    %v182 = vld [vmem:[#allocation6 + $0x338] sm:$0xff]
    %v183 = vld [vmem:[#allocation6 + $0x340] sm:$0xff]
    %v184 = vld [vmem:[#allocation6 + $0x348] sm:$0xff]
    %v185 = vld [vmem:[#allocation6 + $0x350] sm:$0xff]
    %v186 = vld [vmem:[#allocation6 + $0x358] sm:$0xff]
    %v187 = vld [vmem:[#allocation6 + $0x360] sm:$0xff]
    %v188 = vld [vmem:[#allocation6 + $0x368] sm:$0xff]
    %v189 = vld [vmem:[#allocation6 + $0x370] sm:$0xff]
    %v190 = vld [vmem:[#allocation6 + $0x378] sm:$0xff]
    %v191 = vld [vmem:[#allocation6 + $0x380] sm:$0xff]
    %v192 = vld [vmem:[#allocation6 + $0x388] sm:$0xff]
    %v193 = vld [vmem:[#allocation6 + $0x390] sm:$0xff]
    %v194 = vld [vmem:[#allocation6 + $0x398] sm:$0xff]
    %v195 = vld [vmem:[#allocation6 + $0x3a0] sm:$0xff]
    %v196 = vld [vmem:[#allocation6 + $0x3a8] sm:$0xff]
    %v197 = vld [vmem:[#allocation6 + $0x3b0] sm:$0xff]
    %v198 = vld [vmem:[#allocation6 + $0x3b8] sm:$0xff]
    %v199 = vld [vmem:[#allocation6 + $0x3c0] sm:$0xff]
    %v200 = vld [vmem:[#allocation6 + $0x3c8] sm:$0xff]
    %v201 = vld [vmem:[#allocation6 + $0x3d0] sm:$0xff]
    %v202 = vld [vmem:[#allocation6 + $0x3d8] sm:$0xff]
    %v203 = vld [vmem:[#allocation6 + $0x3e0] sm:$0xff]
    %v204 = vld [vmem:[#allocation6 + $0x3e8] sm:$0xff]
    %v205 = vld [vmem:[#allocation6 + $0x3f0] sm:$0xff]
    %v206 = vld [vmem:[#allocation6 + $0x3f8] sm:$0xff]
    %v207 = vld [vmem:[#allocation6 + $0x400] sm:$0xff]
    %v208 = vld [vmem:[#allocation6 + $0x408] sm:$0xff]
    %v209 = vld [vmem:[#allocation6 + $0x410] sm:$0xff]
    %v210 = vld [vmem:[#allocation6 + $0x418] sm:$0xff]
    %v211 = vld [vmem:[#allocation6 + $0x420] sm:$0xff]
    %v212 = vld [vmem:[#allocation6 + $0x428] sm:$0xff]
    %v213 = vld [vmem:[#allocation6 + $0x430] sm:$0xff]
    %v214 = vld [vmem:[#allocation6 + $0x438] sm:$0xff]
    %v215 = vld [vmem:[#allocation6 + $0x440] sm:$0xff]
    %v216 = vld [vmem:[#allocation6 + $0x448] sm:$0xff]
    %v217 = vld [vmem:[#allocation6 + $0x450] sm:$0xff]
    %v218 = vld [vmem:[#allocation6 + $0x458] sm:$0xff]
    %v219 = vld [vmem:[#allocation6 + $0x460] sm:$0xff]
    %v220 = vld [vmem:[#allocation6 + $0x468] sm:$0xff]
    %v221 = vld [vmem:[#allocation6 + $0x470] sm:$0xff]
    %v222 = vld [vmem:[#allocation6 + $0x478] sm:$0xff]
    %v223 = vld [vmem:[#allocation6 + $0x480] sm:$0xff]
    %v224 = vld [vmem:[#allocation6 + $0x488] sm:$0xff]
    %v225 = vld [vmem:[#allocation6 + $0x490] sm:$0xff]
    %v226 = vld [vmem:[#allocation6 + $0x498] sm:$0xff]
    %v227 = vld [vmem:[#allocation6 + $0x4a0] sm:$0xff]
    %v228 = vld [vmem:[#allocation6 + $0x4a8] sm:$0xff]
    %v229 = vld [vmem:[#allocation6 + $0x4b0] sm:$0xff]
    %v230 = vld [vmem:[#allocation6 + $0x4b8] sm:$0xff]
    %v231 = vld [vmem:[#allocation6 + $0x4c0] sm:$0xff]
    %v232 = vld [vmem:[#allocation6 + $0x4c8] sm:$0xff]
    %v233 = vld [vmem:[#allocation6 + $0x4d0] sm:$0xff]
    %v234 = vld [vmem:[#allocation6 + $0x4d8] sm:$0xff]
    %v235 = vld [vmem:[#allocation6 + $0x4e0] sm:$0xff]
    %v236 = vld [vmem:[#allocation6 + $0x4e8] sm:$0xff]
    %v237 = vld [vmem:[#allocation6 + $0x4f0] sm:$0xff]
    %v238 = vld [vmem:[#allocation6 + $0x4f8] sm:$0xff]
    %v239 = vld [vmem:[#allocation6 + $0x500] sm:$0xff]
    %v240 = vld [vmem:[#allocation6 + $0x508] sm:$0xff]
    %v241 = vld [vmem:[#allocation6 + $0x510] sm:$0xff]
    %v242 = vld [vmem:[#allocation6 + $0x518] sm:$0xff]
    %v243 = vld [vmem:[#allocation6 + $0x520] sm:$0xff]
    %v244 = vld [vmem:[#allocation6 + $0x528] sm:$0xff]
    %v245 = vld [vmem:[#allocation6 + $0x530] sm:$0xff]
    %v246 = vld [vmem:[#allocation6 + $0x538] sm:$0xff]
    %v247 = vld [vmem:[#allocation6 + $0x540] sm:$0xff]
    %v248 = vld [vmem:[#allocation6 + $0x548] sm:$0xff]
    %v249 = vld [vmem:[#allocation6 + $0x550] sm:$0xff]
    %v250 = vld [vmem:[#allocation6 + $0x558] sm:$0xff]
    %v251 = vld [vmem:[#allocation6 + $0x560] sm:$0xff]
    %v252 = vld [vmem:[#allocation6 + $0x568] sm:$0xff]
    %v253 = vld [vmem:[#allocation6 + $0x570] sm:$0xff]
    %v254 = vld [vmem:[#allocation6 + $0x578] sm:$0xff]
    %v255 = vld [vmem:[#allocation6 + $0x580] sm:$0xff]
    %v256 = vld [vmem:[#allocation6 + $0x588] sm:$0xff]
    %v257 = vld [vmem:[#allocation6 + $0x590] sm:$0xff]
    %v258 = vld [vmem:[#allocation6 + $0x598] sm:$0xff]
    %v259 = vld [vmem:[#allocation6 + $0x5a0] sm:$0xff]
    %v260 = vld [vmem:[#allocation6 + $0x5a8] sm:$0xff]
    %v261 = vld [vmem:[#allocation6 + $0x5b0] sm:$0xff]
    %v262 = vld [vmem:[#allocation6 + $0x5b8] sm:$0xff]
    %v263 = vld [vmem:[#allocation6 + $0x5c0] sm:$0xff]
    %v264 = vld [vmem:[#allocation6 + $0x5c8] sm:$0xff]
    %v265 = vld [vmem:[#allocation6 + $0x5d0] sm:$0xff]
    %v266 = vld [vmem:[#allocation6 + $0x5d8] sm:$0xff]
    %v267 = vld [vmem:[#allocation6 + $0x5e0] sm:$0xff]
    %v268 = vld [vmem:[#allocation6 + $0x5e8] sm:$0xff]
    %v269 = vld [vmem:[#allocation6 + $0x5f0] sm:$0xff]
    %v270 = vld [vmem:[#allocation6 + $0x5f8] sm:$0xff]
    %v271 = vld [vmem:[#allocation6 + $0x600] sm:$0xff]
    %v272 = vld [vmem:[#allocation6 + $0x608] sm:$0xff]
    %v273 = vld [vmem:[#allocation6 + $0x610] sm:$0xff]
    %v274 = vld [vmem:[#allocation6 + $0x618] sm:$0xff]
    %v275 = vld [vmem:[#allocation6 + $0x620] sm:$0xff]
    %v276 = vld [vmem:[#allocation6 + $0x628] sm:$0xff]
    %v277 = vld [vmem:[#allocation6 + $0x630] sm:$0xff]
    %v278 = vld [vmem:[#allocation6 + $0x638] sm:$0xff]
    %v279 = vld [vmem:[#allocation6 + $0x640] sm:$0xff]
    %v280 = vld [vmem:[#allocation6 + $0x648] sm:$0xff]
    %v281 = vld [vmem:[#allocation6 + $0x650] sm:$0xff]
    %v282 = vld [vmem:[#allocation6 + $0x658] sm:$0xff]
    %v283 = vld [vmem:[#allocation6 + $0x660] sm:$0xff]
    %v284 = vld [vmem:[#allocation6 + $0x668] sm:$0xff]
    %v285 = vld [vmem:[#allocation6 + $0x670] sm:$0xff]
    %v286 = vld [vmem:[#allocation6 + $0x678] sm:$0xff]
    %v287 = vld [vmem:[#allocation6 + $0x680] sm:$0xff]
    %v288 = vld [vmem:[#allocation6 + $0x688] sm:$0xff]
    %v289 = vld [vmem:[#allocation6 + $0x690] sm:$0xff]
    %v290 = vld [vmem:[#allocation6 + $0x698] sm:$0xff]
    %v291 = vld [vmem:[#allocation6 + $0x6a0] sm:$0xff]
    %v292 = vld [vmem:[#allocation6 + $0x6a8] sm:$0xff]
    %v293 = vld [vmem:[#allocation6 + $0x6b0] sm:$0xff]
    %v294 = vld [vmem:[#allocation6 + $0x6b8] sm:$0xff]
    %v295 = vld [vmem:[#allocation6 + $0x6c0] sm:$0xff]
    %v296 = vld [vmem:[#allocation6 + $0x6c8] sm:$0xff]
    %v297 = vld [vmem:[#allocation6 + $0x6d0] sm:$0xff]
    %v298 = vld [vmem:[#allocation6 + $0x6d8] sm:$0xff]
    %v299 = vld [vmem:[#allocation6 + $0x6e0] sm:$0xff]
    %v300 = vld [vmem:[#allocation6 + $0x6e8] sm:$0xff]
    %v301 = vld [vmem:[#allocation6 + $0x6f0] sm:$0xff]
    %v302 = vld [vmem:[#allocation6 + $0x6f8] sm:$0xff]
    %v303 = vld [vmem:[#allocation6 + $0x700] sm:$0xff]
    %v304 = vld [vmem:[#allocation6 + $0x708] sm:$0xff]
    %v305 = vld [vmem:[#allocation6 + $0x710] sm:$0xff]
    %v306 = vld [vmem:[#allocation6 + $0x718] sm:$0xff]
    %v307 = vld [vmem:[#allocation6 + $0x720] sm:$0xff]
    %v308 = vld [vmem:[#allocation6 + $0x728] sm:$0xff]
    %v309 = vld [vmem:[#allocation6 + $0x730] sm:$0xff]
    %v310 = vld [vmem:[#allocation6 + $0x738] sm:$0xff]
    %v311 = vld [vmem:[#allocation6 + $0x740] sm:$0xff]
    %v312 = vld [vmem:[#allocation6 + $0x748] sm:$0xff]
    %v313 = vld [vmem:[#allocation6 + $0x750] sm:$0xff]
    %v314 = vld [vmem:[#allocation6 + $0x758] sm:$0xff]
    %v315 = vld [vmem:[#allocation6 + $0x760] sm:$0xff]
    %v316 = vld [vmem:[#allocation6 + $0x768] sm:$0xff]
    %v317 = vld [vmem:[#allocation6 + $0x770] sm:$0xff]
    %v318 = vld [vmem:[#allocation6 + $0x778] sm:$0xff]
    %v321 = vunpack.c.l.b16 %v77
    %v322 = vunpack.c.h.b16 %v77
    %v323 = vunpack.c.l.b16 %v78
    %v324 = vpack.c.b16 %v321, %v321
    %v325 = vpack.c.b16 %v322, %v322
    %v326 = vpack.c.b16 %v323, %v323
    %v570 = vunpack.c.l.b16 %v79
    %v571 = vunpack.c.h.b16 %v79
    %v572 = vunpack.c.l.b16 %v80
    %v573 = vunpack.c.h.b16 %v80
    %v574 = vunpack.c.l.b16 %v81
    %v575 = vunpack.c.h.b16 %v81
    %v576 = vunpack.c.l.b16 %v82
    %v577 = vunpack.c.h.b16 %v82
    %v578 = vunpack.c.l.b16 %v83
    %v579 = vunpack.c.h.b16 %v83
    %v580 = vunpack.c.l.b16 %v84
    %v581 = vunpack.c.h.b16 %v84
    %v582 = vunpack.c.l.b16 %v85
    %v583 = vunpack.c.h.b16 %v85
    %v584 = vunpack.c.l.b16 %v86
    %v585 = vunpack.c.h.b16 %v86
    %v586 = vunpack.c.l.b16 %v87
    %v587 = vunpack.c.h.b16 %v87
    %v588 = vunpack.c.l.b16 %v88
    %v589 = vunpack.c.h.b16 %v88
    %v590 = vunpack.c.l.b16 %v89
    %v591 = vunpack.c.h.b16 %v89
    %v592 = vunpack.c.l.b16 %v90
    %v593 = vunpack.c.h.b16 %v90
    %v594 = vunpack.c.l.b16 %v91
    %v595 = vunpack.c.h.b16 %v91
    %v596 = vunpack.c.l.b16 %v92
    %v597 = vunpack.c.h.b16 %v92
    %v598 = vunpack.c.l.b16 %v93
    %v599 = vunpack.c.h.b16 %v93
    %v600 = vunpack.c.l.b16 %v94
    %v601 = vunpack.c.h.b16 %v94
    %v602 = vunpack.c.l.b16 %v95
    %v603 = vunpack.c.h.b16 %v95
    %v604 = vunpack.c.l.b16 %v96
    %v605 = vunpack.c.h.b16 %v96
    %v606 = vunpack.c.l.b16 %v97
    %v607 = vunpack.c.h.b16 %v97
    %v608 = vunpack.c.l.b16 %v98
    %v609 = vunpack.c.h.b16 %v98
    %v610 = vunpack.c.l.b16 %v99
    %v611 = vunpack.c.h.b16 %v99
    %v612 = vunpack.c.l.b16 %v100
    %v613 = vunpack.c.h.b16 %v100
    %v614 = vunpack.c.l.b16 %v101
    %v615 = vunpack.c.h.b16 %v101
    %v616 = vunpack.c.l.b16 %v102
    %v617 = vunpack.c.h.b16 %v102
    %v618 = vunpack.c.l.b16 %v103
    %v619 = vunpack.c.h.b16 %v103
    %v620 = vunpack.c.l.b16 %v104
    %v621 = vunpack.c.h.b16 %v104
    %v622 = vunpack.c.l.b16 %v105
    %v623 = vunpack.c.h.b16 %v105
    %v624 = vunpack.c.l.b16 %v106
    %v625 = vunpack.c.h.b16 %v106
    %v626 = vunpack.c.l.b16 %v107
    %v627 = vunpack.c.h.b16 %v107
    %v628 = vunpack.c.l.b16 %v108
    %v629 = vunpack.c.h.b16 %v108
    %v630 = vunpack.c.l.b16 %v109
    %v631 = vunpack.c.h.b16 %v109
    %v632 = vunpack.c.l.b16 %v110
    %v633 = vunpack.c.h.b16 %v110
    %v634 = vunpack.c.l.b16 %v111
    %v635 = vunpack.c.h.b16 %v111
    %v636 = vunpack.c.l.b16 %v112
    %v637 = vunpack.c.h.b16 %v112
    %v638 = vunpack.c.l.b16 %v113
    %v639 = vunpack.c.h.b16 %v113
    %v640 = vunpack.c.l.b16 %v114
    %v641 = vunpack.c.h.b16 %v114
    %v642 = vunpack.c.l.b16 %v115
    %v643 = vunpack.c.h.b16 %v115
    %v644 = vunpack.c.l.b16 %v116
    %v645 = vunpack.c.h.b16 %v116
    %v646 = vunpack.c.l.b16 %v117
    %v647 = vunpack.c.h.b16 %v117
    %v648 = vunpack.c.l.b16 %v118
    %v649 = vunpack.c.h.b16 %v118
    %v650 = vunpack.c.l.b16 %v119
    %v651 = vunpack.c.h.b16 %v119
    %v652 = vunpack.c.l.b16 %v120
    %v653 = vunpack.c.h.b16 %v120
    %v654 = vunpack.c.l.b16 %v121
    %v655 = vunpack.c.h.b16 %v121
    %v656 = vunpack.c.l.b16 %v122
    %v657 = vunpack.c.h.b16 %v122
    %v658 = vunpack.c.l.b16 %v123
    %v659 = vunpack.c.h.b16 %v123
    %v660 = vunpack.c.l.b16 %v124
    %v661 = vunpack.c.h.b16 %v124
    %v662 = vunpack.c.l.b16 %v125
    %v663 = vunpack.c.h.b16 %v125
    %v664 = vunpack.c.l.b16 %v126
    %v665 = vunpack.c.h.b16 %v126
    %v666 = vunpack.c.l.b16 %v127
    %v667 = vunpack.c.h.b16 %v127
    %v668 = vunpack.c.l.b16 %v128
    %v669 = vunpack.c.h.b16 %v128
    %v670 = vunpack.c.l.b16 %v129
    %v671 = vunpack.c.h.b16 %v129
    %v672 = vunpack.c.l.b16 %v130
    %v673 = vunpack.c.h.b16 %v130
    %v674 = vunpack.c.l.b16 %v131
    %v675 = vunpack.c.h.b16 %v131
    %v676 = vunpack.c.l.b16 %v132
    %v677 = vunpack.c.h.b16 %v132
    %v678 = vunpack.c.l.b16 %v133
    %v679 = vunpack.c.h.b16 %v133
    %v680 = vunpack.c.l.b16 %v134
    %v681 = vunpack.c.h.b16 %v134
    %v682 = vunpack.c.l.b16 %v135
    %v683 = vunpack.c.h.b16 %v135
    %v684 = vunpack.c.l.b16 %v136
    %v685 = vunpack.c.h.b16 %v136
    %v686 = vunpack.c.l.b16 %v137
    %v687 = vunpack.c.h.b16 %v137
    %v688 = vunpack.c.l.b16 %v138
    %v689 = vunpack.c.h.b16 %v138
    %v690 = vunpack.c.l.b16 %v139
    %v691 = vunpack.c.h.b16 %v139
    %v692 = vunpack.c.l.b16 %v140
    %v693 = vunpack.c.h.b16 %v140
    %v694 = vunpack.c.l.b16 %v141
    %v695 = vunpack.c.h.b16 %v141
    %v696 = vunpack.c.l.b16 %v142
    %v697 = vunpack.c.h.b16 %v142
    %v698 = vunpack.c.l.b16 %v143
    %v699 = vunpack.c.h.b16 %v143
    %v700 = vunpack.c.l.b16 %v144
    %v701 = vunpack.c.h.b16 %v144
    %v702 = vunpack.c.l.b16 %v145
    %v703 = vunpack.c.h.b16 %v145
    %v704 = vunpack.c.l.b16 %v146
    %v705 = vunpack.c.h.b16 %v146
    %v706 = vunpack.c.l.b16 %v147
    %v707 = vunpack.c.h.b16 %v147
    %v708 = vunpack.c.l.b16 %v148
    %v709 = vunpack.c.h.b16 %v148
    %v710 = vunpack.c.l.b16 %v149
    %v711 = vunpack.c.h.b16 %v149
    %v712 = vunpack.c.l.b16 %v150
    %v713 = vunpack.c.h.b16 %v150
    %v714 = vunpack.c.l.b16 %v151
    %v715 = vunpack.c.h.b16 %v151
    %v716 = vunpack.c.l.b16 %v152
    %v717 = vunpack.c.h.b16 %v152
    %v718 = vunpack.c.l.b16 %v153
    %v719 = vunpack.c.h.b16 %v153
    %v720 = vunpack.c.l.b16 %v154
    %v721 = vunpack.c.h.b16 %v154
    %v722 = vunpack.c.l.b16 %v155
    %v723 = vunpack.c.h.b16 %v155
    %v724 = vunpack.c.l.b16 %v156
    %v725 = vunpack.c.h.b16 %v156
    %v726 = vunpack.c.l.b16 %v157
    %v727 = vunpack.c.h.b16 %v157
    %v728 = vunpack.c.l.b16 %v158
    %v729 = vunpack.c.h.b16 %v158
    %v730 = vunpack.c.l.b16 %v159
    %v731 = vunpack.c.h.b16 %v159
    %v732 = vunpack.c.l.b16 %v160
    %v733 = vunpack.c.h.b16 %v160
    %v734 = vunpack.c.l.b16 %v161
    %v735 = vunpack.c.h.b16 %v161
    %v736 = vunpack.c.l.b16 %v162
    %v737 = vunpack.c.h.b16 %v162
    %v738 = vunpack.c.l.b16 %v163
    %v739 = vunpack.c.h.b16 %v163
    %v740 = vunpack.c.l.b16 %v164
    %v741 = vunpack.c.h.b16 %v164
    %v742 = vunpack.c.l.b16 %v165
    %v743 = vunpack.c.h.b16 %v165
    %v744 = vunpack.c.l.b16 %v166
    %v745 = vunpack.c.h.b16 %v166
    %v746 = vunpack.c.l.b16 %v167
    %v747 = vunpack.c.h.b16 %v167
    %v748 = vunpack.c.l.b16 %v168
    %v749 = vunpack.c.h.b16 %v168
    %v750 = vunpack.c.l.b16 %v169
    %v751 = vunpack.c.h.b16 %v169
    %v752 = vunpack.c.l.b16 %v170
    %v753 = vunpack.c.h.b16 %v170
    %v754 = vunpack.c.l.b16 %v171
    %v755 = vunpack.c.h.b16 %v171
    %v756 = vunpack.c.l.b16 %v172
    %v757 = vunpack.c.h.b16 %v172
    %v758 = vunpack.c.l.b16 %v173
    %v759 = vunpack.c.h.b16 %v173
    %v760 = vunpack.c.l.b16 %v174
    %v761 = vunpack.c.h.b16 %v174
    %v762 = vunpack.c.l.b16 %v175
    %v763 = vunpack.c.h.b16 %v175
    %v764 = vunpack.c.l.b16 %v176
    %v765 = vunpack.c.h.b16 %v176
    %v766 = vunpack.c.l.b16 %v177
    %v767 = vunpack.c.h.b16 %v177
    %v768 = vunpack.c.l.b16 %v178
    %v769 = vunpack.c.h.b16 %v178
    %v770 = vunpack.c.l.b16 %v179
    %v771 = vunpack.c.h.b16 %v179
    %v772 = vunpack.c.l.b16 %v180
    %v773 = vunpack.c.h.b16 %v180
    %v774 = vunpack.c.l.b16 %v181
    %v775 = vunpack.c.h.b16 %v181
    %v776 = vunpack.c.l.b16 %v182
    %v777 = vunpack.c.h.b16 %v182
    %v778 = vunpack.c.l.b16 %v183
    %v779 = vunpack.c.h.b16 %v183
    %v780 = vunpack.c.l.b16 %v184
    %v781 = vunpack.c.h.b16 %v184
    %v782 = vunpack.c.l.b16 %v185
    %v783 = vunpack.c.h.b16 %v185
    %v784 = vunpack.c.l.b16 %v186
    %v785 = vunpack.c.h.b16 %v186
    %v786 = vunpack.c.l.b16 %v187
    %v787 = vunpack.c.h.b16 %v187
    %v788 = vunpack.c.l.b16 %v188
    %v789 = vunpack.c.h.b16 %v188
    %v790 = vunpack.c.l.b16 %v189
    %v791 = vunpack.c.h.b16 %v189
    %v792 = vunpack.c.l.b16 %v190
    %v793 = vunpack.c.h.b16 %v190
    %v794 = vunpack.c.l.b16 %v191
    %v795 = vunpack.c.h.b16 %v191
    %v796 = vunpack.c.l.b16 %v192
    %v797 = vunpack.c.h.b16 %v192
    %v798 = vunpack.c.l.b16 %v193
    %v799 = vunpack.c.h.b16 %v193
    %v800 = vunpack.c.l.b16 %v194
    %v801 = vunpack.c.h.b16 %v194
    %v802 = vunpack.c.l.b16 %v195
    %v803 = vunpack.c.h.b16 %v195
    %v804 = vunpack.c.l.b16 %v196
    %v805 = vunpack.c.h.b16 %v196
    %v806 = vunpack.c.l.b16 %v197
    %v807 = vunpack.c.h.b16 %v197
    %v808 = vunpack.c.l.b16 %v198
    %v809 = vunpack.c.h.b16 %v198
    %v810 = vunpack.c.l.b16 %v199
    %v811 = vunpack.c.h.b16 %v199
    %v812 = vunpack.c.l.b16 %v200
    %v813 = vunpack.c.h.b16 %v200
    %v814 = vunpack.c.l.b16 %v201
    %v815 = vunpack.c.h.b16 %v201
    %v816 = vunpack.c.l.b16 %v202
    %v817 = vunpack.c.h.b16 %v202
    %v818 = vunpack.c.l.b16 %v203
    %v819 = vunpack.c.h.b16 %v203
    %v820 = vunpack.c.l.b16 %v204
    %v821 = vunpack.c.h.b16 %v204
    %v822 = vunpack.c.l.b16 %v205
    %v823 = vunpack.c.h.b16 %v205
    %v824 = vunpack.c.l.b16 %v206
    %v825 = vunpack.c.h.b16 %v206
    %v826 = vunpack.c.l.b16 %v207
    %v827 = vunpack.c.h.b16 %v207
    %v828 = vunpack.c.l.b16 %v208
    %v829 = vunpack.c.h.b16 %v208
    %v830 = vunpack.c.l.b16 %v209
    %v831 = vunpack.c.h.b16 %v209
    %v832 = vunpack.c.l.b16 %v210
    %v833 = vunpack.c.h.b16 %v210
    %v834 = vunpack.c.l.b16 %v211
    %v835 = vunpack.c.h.b16 %v211
    %v836 = vunpack.c.l.b16 %v212
    %v837 = vunpack.c.h.b16 %v212
    %v838 = vunpack.c.l.b16 %v213
    %v839 = vunpack.c.h.b16 %v213
    %v840 = vunpack.c.l.b16 %v214
    %v841 = vunpack.c.h.b16 %v214
    %v842 = vunpack.c.l.b16 %v215
    %v843 = vunpack.c.h.b16 %v215
    %v844 = vunpack.c.l.b16 %v216
    %v845 = vunpack.c.h.b16 %v216
    %v846 = vunpack.c.l.b16 %v217
    %v847 = vunpack.c.h.b16 %v217
    %v848 = vunpack.c.l.b16 %v218
    %v849 = vunpack.c.h.b16 %v218
    %v850 = vunpack.c.l.b16 %v219
    %v851 = vunpack.c.h.b16 %v219
    %v852 = vunpack.c.l.b16 %v220
    %v853 = vunpack.c.h.b16 %v220
    %v854 = vunpack.c.l.b16 %v221
    %v855 = vunpack.c.h.b16 %v221
    %v856 = vunpack.c.l.b16 %v222
    %v857 = vunpack.c.h.b16 %v222
    %v858 = vunpack.c.l.b16 %v223
    %v859 = vunpack.c.h.b16 %v223
    %v860 = vunpack.c.l.b16 %v224
    %v861 = vunpack.c.h.b16 %v224
    %v862 = vunpack.c.l.b16 %v225
    %v863 = vunpack.c.h.b16 %v225
    %v864 = vunpack.c.l.b16 %v226
    %v865 = vunpack.c.h.b16 %v226
    %v866 = vunpack.c.l.b16 %v227
    %v867 = vunpack.c.h.b16 %v227
    %v868 = vunpack.c.l.b16 %v228
    %v869 = vunpack.c.h.b16 %v228
    %v870 = vunpack.c.l.b16 %v229
    %v871 = vunpack.c.h.b16 %v229
    %v872 = vunpack.c.l.b16 %v230
    %v873 = vunpack.c.h.b16 %v230
    %v874 = vunpack.c.l.b16 %v231
    %v875 = vunpack.c.h.b16 %v231
    %v876 = vunpack.c.l.b16 %v232
    %v877 = vunpack.c.h.b16 %v232
    %v878 = vunpack.c.l.b16 %v233
    %v879 = vunpack.c.h.b16 %v233
    %v880 = vunpack.c.l.b16 %v234
    %v881 = vunpack.c.h.b16 %v234
    %v882 = vunpack.c.l.b16 %v235
    %v883 = vunpack.c.h.b16 %v235
    %v884 = vunpack.c.l.b16 %v236
    %v885 = vunpack.c.h.b16 %v236
    %v886 = vunpack.c.l.b16 %v237
    %v887 = vunpack.c.h.b16 %v237
    %v888 = vunpack.c.l.b16 %v238
    %v889 = vunpack.c.h.b16 %v238
    %v890 = vunpack.c.l.b16 %v239
    %v891 = vunpack.c.h.b16 %v239
    %v892 = vunpack.c.l.b16 %v240
    %v893 = vunpack.c.h.b16 %v240
    %v894 = vunpack.c.l.b16 %v241
    %v895 = vunpack.c.h.b16 %v241
    %v896 = vunpack.c.l.b16 %v242
    %v897 = vunpack.c.h.b16 %v242
    %v898 = vunpack.c.l.b16 %v243
    %v899 = vunpack.c.h.b16 %v243
    %v900 = vunpack.c.l.b16 %v244
    %v901 = vunpack.c.h.b16 %v244
    %v902 = vunpack.c.l.b16 %v245
    %v903 = vunpack.c.h.b16 %v245
    %v904 = vunpack.c.l.b16 %v246
    %v905 = vunpack.c.h.b16 %v246
    %v906 = vunpack.c.l.b16 %v247
    %v907 = vunpack.c.h.b16 %v247
    %v908 = vunpack.c.l.b16 %v248
    %v909 = vunpack.c.h.b16 %v248
    %v910 = vunpack.c.l.b16 %v249
    %v911 = vunpack.c.h.b16 %v249
    %v912 = vunpack.c.l.b16 %v250
    %v913 = vunpack.c.h.b16 %v250
    %v914 = vunpack.c.l.b16 %v251
    %v915 = vunpack.c.h.b16 %v251
    %v916 = vunpack.c.l.b16 %v252
    %v917 = vunpack.c.h.b16 %v252
    %v918 = vunpack.c.l.b16 %v253
    %v919 = vunpack.c.h.b16 %v253
    %v920 = vunpack.c.l.b16 %v254
    %v921 = vunpack.c.h.b16 %v254
    %v922 = vunpack.c.l.b16 %v255
    %v923 = vunpack.c.h.b16 %v255
    %v924 = vunpack.c.l.b16 %v256
    %v925 = vunpack.c.h.b16 %v256
    %v926 = vunpack.c.l.b16 %v257
    %v927 = vunpack.c.h.b16 %v257
    %v928 = vunpack.c.l.b16 %v258
    %v929 = vunpack.c.h.b16 %v258
    %v930 = vunpack.c.l.b16 %v259
    %v931 = vunpack.c.h.b16 %v259
    %v932 = vunpack.c.l.b16 %v260
    %v933 = vunpack.c.h.b16 %v260
    %v934 = vunpack.c.l.b16 %v261
    %v935 = vunpack.c.h.b16 %v261
    %v936 = vunpack.c.l.b16 %v262
    %v937 = vunpack.c.h.b16 %v262
    %v938 = vunpack.c.l.b16 %v263
    %v939 = vunpack.c.h.b16 %v263
    %v940 = vunpack.c.l.b16 %v264
    %v941 = vunpack.c.h.b16 %v264
    %v942 = vunpack.c.l.b16 %v265
    %v943 = vunpack.c.h.b16 %v265
    %v944 = vunpack.c.l.b16 %v266
    %v945 = vunpack.c.h.b16 %v266
    %v946 = vunpack.c.l.b16 %v267
    %v947 = vunpack.c.h.b16 %v267
    %v948 = vunpack.c.l.b16 %v268
    %v949 = vunpack.c.h.b16 %v268
    %v950 = vunpack.c.l.b16 %v269
    %v951 = vunpack.c.h.b16 %v269
    %v952 = vunpack.c.l.b16 %v270
    %v953 = vunpack.c.h.b16 %v270
    %v954 = vunpack.c.l.b16 %v271
    %v955 = vunpack.c.h.b16 %v271
    %v956 = vunpack.c.l.b16 %v272
    %v957 = vunpack.c.h.b16 %v272
    %v958 = vunpack.c.l.b16 %v273
    %v959 = vunpack.c.h.b16 %v273
    %v960 = vunpack.c.l.b16 %v274
    %v961 = vunpack.c.h.b16 %v274
    %v962 = vunpack.c.l.b16 %v275
    %v963 = vunpack.c.h.b16 %v275
    %v964 = vunpack.c.l.b16 %v276
    %v965 = vunpack.c.h.b16 %v276
    %v966 = vunpack.c.l.b16 %v277
    %v967 = vunpack.c.h.b16 %v277
    %v968 = vunpack.c.l.b16 %v278
    %v969 = vunpack.c.h.b16 %v278
    %v970 = vunpack.c.l.b16 %v279
    %v971 = vunpack.c.h.b16 %v279
    %v972 = vunpack.c.l.b16 %v280
    %v973 = vunpack.c.h.b16 %v280
    %v974 = vunpack.c.l.b16 %v281
    %v975 = vunpack.c.h.b16 %v281
    %v976 = vunpack.c.l.b16 %v282
    %v977 = vunpack.c.h.b16 %v282
    %v978 = vunpack.c.l.b16 %v283
    %v979 = vunpack.c.h.b16 %v283
    %v980 = vunpack.c.l.b16 %v284
    %v981 = vunpack.c.h.b16 %v284
    %v982 = vunpack.c.l.b16 %v285
    %v983 = vunpack.c.h.b16 %v285
    %v984 = vunpack.c.l.b16 %v286
    %v985 = vunpack.c.h.b16 %v286
    %v986 = vunpack.c.l.b16 %v287
    %v987 = vunpack.c.h.b16 %v287
    %v988 = vunpack.c.l.b16 %v288
    %v989 = vunpack.c.h.b16 %v288
    %v990 = vunpack.c.l.b16 %v289
    %v991 = vunpack.c.h.b16 %v289
    %v992 = vunpack.c.l.b16 %v290
    %v993 = vunpack.c.h.b16 %v290
    %v994 = vunpack.c.l.b16 %v291
    %v995 = vunpack.c.h.b16 %v291
    %v996 = vunpack.c.l.b16 %v292
    %v997 = vunpack.c.h.b16 %v292
    %v998 = vunpack.c.l.b16 %v293
    %v999 = vunpack.c.h.b16 %v293
    %v1000 = vunpack.c.l.b16 %v294
    %v1001 = vunpack.c.h.b16 %v294
    %v1002 = vunpack.c.l.b16 %v295
    %v1003 = vunpack.c.h.b16 %v295
    %v1004 = vunpack.c.l.b16 %v296
    %v1005 = vunpack.c.h.b16 %v296
    %v1006 = vunpack.c.l.b16 %v297
    %v1007 = vunpack.c.h.b16 %v297
    %v1008 = vunpack.c.l.b16 %v298
    %v1009 = vunpack.c.h.b16 %v298
    %v1010 = vunpack.c.l.b16 %v299
    %v1011 = vunpack.c.h.b16 %v299
    %v1012 = vunpack.c.l.b16 %v300
    %v1013 = vunpack.c.h.b16 %v300
    %v1014 = vunpack.c.l.b16 %v301
    %v1015 = vunpack.c.h.b16 %v301
    %v1016 = vunpack.c.l.b16 %v302
    %v1017 = vunpack.c.h.b16 %v302
    %v1018 = vunpack.c.l.b16 %v303
    %v1019 = vunpack.c.h.b16 %v303
    %v1020 = vunpack.c.l.b16 %v304
    %v1021 = vunpack.c.h.b16 %v304
    %v1022 = vunpack.c.l.b16 %v305
    %v1023 = vunpack.c.h.b16 %v305
    %v1024 = vunpack.c.l.b16 %v306
    %v1025 = vunpack.c.h.b16 %v306
    %v1026 = vunpack.c.l.b16 %v307
    %v1027 = vunpack.c.h.b16 %v307
    %v1028 = vunpack.c.l.b16 %v308
    %v1029 = vunpack.c.h.b16 %v308
    %v1030 = vunpack.c.l.b16 %v309
    %v1031 = vunpack.c.h.b16 %v309
    %v1032 = vunpack.c.l.b16 %v310
    %v1033 = vunpack.c.h.b16 %v310
    %v1034 = vunpack.c.l.b16 %v311
    %v1035 = vunpack.c.h.b16 %v311
    %v1036 = vunpack.c.l.b16 %v312
    %v1037 = vunpack.c.h.b16 %v312
    %v1038 = vunpack.c.l.b16 %v313
    %v1039 = vunpack.c.h.b16 %v313
    %v1040 = vunpack.c.l.b16 %v314
    %v1041 = vunpack.c.h.b16 %v314
    %v1042 = vunpack.c.l.b16 %v315
    %v1043 = vunpack.c.h.b16 %v315
    %v1044 = vunpack.c.l.b16 %v316
    %v1045 = vunpack.c.h.b16 %v316
    %v1046 = vunpack.c.l.b16 %v317
    %v1047 = vunpack.c.h.b16 %v317
    %v1048 = vunpack.c.l.b16 %v318
    %v1049 = vunpack.c.h.b16 %v318
    %v1050 = vpack.c.b16 %v580, %v570
    %v1051 = vpack.c.b16 %v581, %v571
    %v1052 = vpack.c.b16 %v582, %v572
    %v1053 = vpack.c.b16 %v583, %v573
    %v1054 = vpack.c.b16 %v584, %v574
    %v1055 = vpack.c.b16 %v585, %v575
    %v1056 = vpack.c.b16 %v586, %v576
    %v1057 = vpack.c.b16 %v587, %v577
    %v1058 = vpack.c.b16 %v588, %v578
    %v1059 = vpack.c.b16 %v589, %v579
    %v1060 = vpack.c.b16 %v600, %v590
    %v1061 = vpack.c.b16 %v601, %v591
    %v1062 = vpack.c.b16 %v602, %v592
    %v1063 = vpack.c.b16 %v603, %v593
    %v1064 = vpack.c.b16 %v604, %v594
    %v1065 = vpack.c.b16 %v605, %v595
    %v1066 = vpack.c.b16 %v606, %v596
    %v1067 = vpack.c.b16 %v607, %v597
    %v1068 = vpack.c.b16 %v608, %v598
    %v1069 = vpack.c.b16 %v609, %v599
    %v1070 = vpack.c.b16 %v620, %v610
    %v1071 = vpack.c.b16 %v621, %v611
    %v1072 = vpack.c.b16 %v622, %v612
    %v1073 = vpack.c.b16 %v623, %v613
    %v1074 = vpack.c.b16 %v624, %v614
    %v1075 = vpack.c.b16 %v625, %v615
    %v1076 = vpack.c.b16 %v626, %v616
    %v1077 = vpack.c.b16 %v627, %v617
    %v1078 = vpack.c.b16 %v628, %v618
    %v1079 = vpack.c.b16 %v629, %v619
    %v1080 = vpack.c.b16 %v640, %v630
    %v1081 = vpack.c.b16 %v641, %v631
    %v1082 = vpack.c.b16 %v642, %v632
    %v1083 = vpack.c.b16 %v643, %v633
    %v1084 = vpack.c.b16 %v644, %v634
    %v1085 = vpack.c.b16 %v645, %v635
    %v1086 = vpack.c.b16 %v646, %v636
    %v1087 = vpack.c.b16 %v647, %v637
    %v1088 = vpack.c.b16 %v648, %v638
    %v1089 = vpack.c.b16 %v649, %v639
    %v1090 = vpack.c.b16 %v660, %v650
    %v1091 = vpack.c.b16 %v661, %v651
    %v1092 = vpack.c.b16 %v662, %v652
    %v1093 = vpack.c.b16 %v663, %v653
    %v1094 = vpack.c.b16 %v664, %v654
    %v1095 = vpack.c.b16 %v665, %v655
    %v1096 = vpack.c.b16 %v666, %v656
    %v1097 = vpack.c.b16 %v667, %v657
    %v1098 = vpack.c.b16 %v668, %v658
    %v1099 = vpack.c.b16 %v669, %v659
    %v1100 = vpack.c.b16 %v680, %v670
    %v1101 = vpack.c.b16 %v681, %v671
    %v1102 = vpack.c.b16 %v682, %v672
    %v1103 = vpack.c.b16 %v683, %v673
    %v1104 = vpack.c.b16 %v684, %v674
    %v1105 = vpack.c.b16 %v685, %v675
    %v1106 = vpack.c.b16 %v686, %v676
    %v1107 = vpack.c.b16 %v687, %v677
    %v1108 = vpack.c.b16 %v688, %v678
    %v1109 = vpack.c.b16 %v689, %v679
    %v1110 = vpack.c.b16 %v700, %v690
    %v1111 = vpack.c.b16 %v701, %v691
    %v1112 = vpack.c.b16 %v702, %v692
    %v1113 = vpack.c.b16 %v703, %v693
    %v1114 = vpack.c.b16 %v704, %v694
    %v1115 = vpack.c.b16 %v705, %v695
    %v1116 = vpack.c.b16 %v706, %v696
    %v1117 = vpack.c.b16 %v707, %v697
    %v1118 = vpack.c.b16 %v708, %v698
    %v1119 = vpack.c.b16 %v709, %v699
    %v1120 = vpack.c.b16 %v720, %v710
    %v1121 = vpack.c.b16 %v721, %v711
    %v1122 = vpack.c.b16 %v722, %v712
    %v1123 = vpack.c.b16 %v723, %v713
    %v1124 = vpack.c.b16 %v724, %v714
    %v1125 = vpack.c.b16 %v725, %v715
    %v1126 = vpack.c.b16 %v726, %v716
    %v1127 = vpack.c.b16 %v727, %v717
    %v1128 = vpack.c.b16 %v728, %v718
    %v1129 = vpack.c.b16 %v729, %v719
    %v1130 = vpack.c.b16 %v740, %v730
    %v1131 = vpack.c.b16 %v741, %v731
    %v1132 = vpack.c.b16 %v742, %v732
    %v1133 = vpack.c.b16 %v743, %v733
    %v1134 = vpack.c.b16 %v744, %v734
    %v1135 = vpack.c.b16 %v745, %v735
    %v1136 = vpack.c.b16 %v746, %v736
    %v1137 = vpack.c.b16 %v747, %v737
    %v1138 = vpack.c.b16 %v748, %v738
    %v1139 = vpack.c.b16 %v749, %v739
    %v1140 = vpack.c.b16 %v760, %v750
    %v1141 = vpack.c.b16 %v761, %v751
    %v1142 = vpack.c.b16 %v762, %v752
    %v1143 = vpack.c.b16 %v763, %v753
    %v1144 = vpack.c.b16 %v764, %v754
    %v1145 = vpack.c.b16 %v765, %v755
    %v1146 = vpack.c.b16 %v766, %v756
    %v1147 = vpack.c.b16 %v767, %v757
    %v1148 = vpack.c.b16 %v768, %v758
    %v1149 = vpack.c.b16 %v769, %v759
    %v1150 = vpack.c.b16 %v780, %v770
    %v1151 = vpack.c.b16 %v781, %v771
    %v1152 = vpack.c.b16 %v782, %v772
    %v1153 = vpack.c.b16 %v783, %v773
    %v1154 = vpack.c.b16 %v784, %v774
    %v1155 = vpack.c.b16 %v785, %v775
    %v1156 = vpack.c.b16 %v786, %v776
    %v1157 = vpack.c.b16 %v787, %v777
    %v1158 = vpack.c.b16 %v788, %v778
    %v1159 = vpack.c.b16 %v789, %v779
    %v1160 = vpack.c.b16 %v800, %v790
    %v1161 = vpack.c.b16 %v801, %v791
    %v1162 = vpack.c.b16 %v802, %v792
    %v1163 = vpack.c.b16 %v803, %v793
    %v1164 = vpack.c.b16 %v804, %v794
    %v1165 = vpack.c.b16 %v805, %v795
    %v1166 = vpack.c.b16 %v806, %v796
    %v1167 = vpack.c.b16 %v807, %v797
    %v1168 = vpack.c.b16 %v808, %v798
    %v1169 = vpack.c.b16 %v809, %v799
    %v1170 = vpack.c.b16 %v820, %v810
    %v1171 = vpack.c.b16 %v821, %v811
    %v1172 = vpack.c.b16 %v822, %v812
    %v1173 = vpack.c.b16 %v823, %v813
    %v1174 = vpack.c.b16 %v824, %v814
    %v1175 = vpack.c.b16 %v825, %v815
    %v1176 = vpack.c.b16 %v826, %v816
    %v1177 = vpack.c.b16 %v827, %v817
    %v1178 = vpack.c.b16 %v828, %v818
    %v1179 = vpack.c.b16 %v829, %v819
    %v1180 = vpack.c.b16 %v840, %v830
    %v1181 = vpack.c.b16 %v841, %v831
    %v1182 = vpack.c.b16 %v842, %v832
    %v1183 = vpack.c.b16 %v843, %v833
    %v1184 = vpack.c.b16 %v844, %v834
    %v1185 = vpack.c.b16 %v845, %v835
    %v1186 = vpack.c.b16 %v846, %v836
    %v1187 = vpack.c.b16 %v847, %v837
    %v1188 = vpack.c.b16 %v848, %v838
    %v1189 = vpack.c.b16 %v849, %v839
    %v1190 = vpack.c.b16 %v860, %v850
    %v1191 = vpack.c.b16 %v861, %v851
    %v1192 = vpack.c.b16 %v862, %v852
    %v1193 = vpack.c.b16 %v863, %v853
    %v1194 = vpack.c.b16 %v864, %v854
    %v1195 = vpack.c.b16 %v865, %v855
    %v1196 = vpack.c.b16 %v866, %v856
    %v1197 = vpack.c.b16 %v867, %v857
    %v1198 = vpack.c.b16 %v868, %v858
    %v1199 = vpack.c.b16 %v869, %v859
    %v1200 = vpack.c.b16 %v880, %v870
    %v1201 = vpack.c.b16 %v881, %v871
    %v1202 = vpack.c.b16 %v882, %v872
    %v1203 = vpack.c.b16 %v883, %v873
    %v1204 = vpack.c.b16 %v884, %v874
    %v1205 = vpack.c.b16 %v885, %v875
    %v1206 = vpack.c.b16 %v886, %v876
    %v1207 = vpack.c.b16 %v887, %v877
    %v1208 = vpack.c.b16 %v888, %v878
    %v1209 = vpack.c.b16 %v889, %v879
    %v1210 = vpack.c.b16 %v900, %v890
    %v1211 = vpack.c.b16 %v901, %v891
    %v1212 = vpack.c.b16 %v902, %v892
    %v1213 = vpack.c.b16 %v903, %v893
    %v1214 = vpack.c.b16 %v904, %v894
    %v1215 = vpack.c.b16 %v905, %v895
    %v1216 = vpack.c.b16 %v906, %v896
    %v1217 = vpack.c.b16 %v907, %v897
    %v1218 = vpack.c.b16 %v908, %v898
    %v1219 = vpack.c.b16 %v909, %v899
    %v1220 = vpack.c.b16 %v920, %v910
    %v1221 = vpack.c.b16 %v921, %v911
    %v1222 = vpack.c.b16 %v922, %v912
    %v1223 = vpack.c.b16 %v923, %v913
    %v1224 = vpack.c.b16 %v924, %v914
    %v1225 = vpack.c.b16 %v925, %v915
    %v1226 = vpack.c.b16 %v926, %v916
    %v1227 = vpack.c.b16 %v927, %v917
    %v1228 = vpack.c.b16 %v928, %v918
    %v1229 = vpack.c.b16 %v929, %v919
    %v1230 = vpack.c.b16 %v940, %v930
    %v1231 = vpack.c.b16 %v941, %v931
    %v1232 = vpack.c.b16 %v942, %v932
    %v1233 = vpack.c.b16 %v943, %v933
    %v1234 = vpack.c.b16 %v944, %v934
    %v1235 = vpack.c.b16 %v945, %v935
    %v1236 = vpack.c.b16 %v946, %v936
    %v1237 = vpack.c.b16 %v947, %v937
    %v1238 = vpack.c.b16 %v948, %v938
    %v1239 = vpack.c.b16 %v949, %v939
    %v1240 = vpack.c.b16 %v960, %v950
    %v1241 = vpack.c.b16 %v961, %v951
    %v1242 = vpack.c.b16 %v962, %v952
    %v1243 = vpack.c.b16 %v963, %v953
    %v1244 = vpack.c.b16 %v964, %v954
    %v1245 = vpack.c.b16 %v965, %v955
    %v1246 = vpack.c.b16 %v966, %v956
    %v1247 = vpack.c.b16 %v967, %v957
    %v1248 = vpack.c.b16 %v968, %v958
    %v1249 = vpack.c.b16 %v969, %v959
    %v1250 = vpack.c.b16 %v980, %v970
    %v1251 = vpack.c.b16 %v981, %v971
    %v1252 = vpack.c.b16 %v982, %v972
    %v1253 = vpack.c.b16 %v983, %v973
    %v1254 = vpack.c.b16 %v984, %v974
    %v1255 = vpack.c.b16 %v985, %v975
    %v1256 = vpack.c.b16 %v986, %v976
    %v1257 = vpack.c.b16 %v987, %v977
    %v1258 = vpack.c.b16 %v988, %v978
    %v1259 = vpack.c.b16 %v989, %v979
    %v1260 = vpack.c.b16 %v1000, %v990
    %v1261 = vpack.c.b16 %v1001, %v991
    %v1262 = vpack.c.b16 %v1002, %v992
    %v1263 = vpack.c.b16 %v1003, %v993
    %v1264 = vpack.c.b16 %v1004, %v994
    %v1265 = vpack.c.b16 %v1005, %v995
    %v1266 = vpack.c.b16 %v1006, %v996
    %v1267 = vpack.c.b16 %v1007, %v997
    %v1268 = vpack.c.b16 %v1008, %v998
    %v1269 = vpack.c.b16 %v1009, %v999
    %v1270 = vpack.c.b16 %v1020, %v1010
    %v1271 = vpack.c.b16 %v1021, %v1011
    %v1272 = vpack.c.b16 %v1022, %v1012
    %v1273 = vpack.c.b16 %v1023, %v1013
    %v1274 = vpack.c.b16 %v1024, %v1014
    %v1275 = vpack.c.b16 %v1025, %v1015
    %v1276 = vpack.c.b16 %v1026, %v1016
    %v1277 = vpack.c.b16 %v1027, %v1017
    %v1278 = vpack.c.b16 %v1028, %v1018
    %v1279 = vpack.c.b16 %v1029, %v1019
    %v1280 = vpack.c.b16 %v1040, %v1030
    %v1281 = vpack.c.b16 %v1041, %v1031
    %v1282 = vpack.c.b16 %v1042, %v1032
    %v1283 = vpack.c.b16 %v1043, %v1033
    %v1284 = vpack.c.b16 %v1044, %v1034
    %v1285 = vpack.c.b16 %v1045, %v1035
    %v1286 = vpack.c.b16 %v1046, %v1036
    %v1287 = vpack.c.b16 %v1047, %v1037
    %v1288 = vpack.c.b16 %v1048, %v1038
    %v1289 = vpack.c.b16 %v1049, %v1039
    %1530 = vmatprep.subr.bf16.mxu0 %v1051
    %1531 = vmatpush1.bf16.msra.mxu0 %v1050
    %1532 = vmatprep.subr.bf16.mxu0 %v1061
    %1533 = vmatpush1.bf16.msra.mxu0 %v1060
    %1534 = vmatprep.subr.bf16.mxu0 %v1071
    %1535 = vmatpush1.bf16.msra.mxu0 %v1070
    %1536 = vmatprep.subr.bf16.mxu0 %v1081
    %1537 = vmatpush1.bf16.msra.mxu0 %v1080
    %1538 = vmatprep.subr.bf16.mxu0 %v1091
    %1539 = vmatpush1.bf16.msra.mxu0 %v1090
    %1540 = vmatprep.subr.bf16.mxu0 %v1101
    %1541 = vmatpush1.bf16.msra.mxu0 %v1100
    %1542 = vmatprep.subr.bf16.mxu0 %v1111
    %1543 = vmatpush1.bf16.msra.mxu0 %v1110
    %1544 = vmatprep.subr.bf16.mxu0 %v1121
    %1545 = vmatpush1.bf16.msra.mxu0 %v1120
    %1546 = vmatprep.subr.bf16.mxu0 %v1131
    %1547 = vmatpush1.bf16.msra.mxu0 %v1130
    %1548 = vmatprep.subr.bf16.mxu0 %v1141
    %1549 = vmatpush1.bf16.msra.mxu0 %v1140
    %1550 = vmatprep.subr.bf16.mxu0 %v1151
    %1551 = vmatpush1.bf16.msra.mxu0 %v1150
    %1552 = vmatprep.subr.bf16.mxu0 %v1161
    %1553 = vmatpush1.bf16.msra.mxu0 %v1160
    %1554 = vmatprep.subr.bf16.mxu0 %v1171
    %1555 = vmatpush1.bf16.msra.mxu0 %v1170
    %1556 = vmatprep.subr.bf16.mxu0 %v1181
    %1557 = vmatpush1.bf16.msra.mxu0 %v1180
    %1558 = vmatprep.subr.bf16.mxu0 %v1191
    %1559 = vmatpush1.bf16.msra.mxu0 %v1190
    %1560 = vmatprep.subr.bf16.mxu0 %v1201
    %1561 = vmatpush1.bf16.msra.mxu0 %v1200
    %1562 = vmatprep.mubr.bf16.mxu0 %v325
    %1563 = vmatmul.mubr.bf16.gmra.mrb[0].mxu0 %v324
    %v1564 = vpop.f32.mrb[0].mxu0
    %v1565 = vadd.f32 0.0, %v1564
    %v1566 = vpop.f32.mrb[0].mxu0
    %v1567 = vadd.f32 0.0, %v1566
    %v1568 = vpop.f32.mrb[0].mxu0
    %v1569 = vpop.f32.mrb[0].mxu0
    %1570 = vdwg.mxu0
    %1571 = vmatprep.subr.bf16.mxu0 %v1211
    %1572 = vmatpush1.bf16.msra.mxu0 %v1210
    %1573 = vmatprep.subr.bf16.mxu0 %v1221
    %1574 = vmatpush1.bf16.msra.mxu0 %v1220
    %1575 = vmatprep.subr.bf16.mxu0 %v1231
    %1576 = vmatpush1.bf16.msra.mxu0 %v1230
    %1577 = vmatprep.subr.bf16.mxu0 %v1241
    %1578 = vmatpush1.bf16.msra.mxu0 %v1240
    %1579 = vmatprep.subr.bf16.mxu0 %v1251
    %1580 = vmatpush1.bf16.msra.mxu0 %v1250
    %1581 = vmatprep.subr.bf16.mxu0 %v1261
    %1582 = vmatpush1.bf16.msra.mxu0 %v1260
    %1583 = vmatprep.subr.bf16.mxu0 %v1271
    %1584 = vmatpush1.bf16.msra.mxu0 %v1270
    %1585 = vmatprep.subr.bf16.mxu0 %v1281
    %1586 = vmatpush1.bf16.msra.mxu0 %v1280
    %1587 = vmatprep.subr.bf16.mxu0 0
    %1588 = vmatpush1.bf16.msra.mxu0 0
    %1589 = vmatprep.subr.bf16.mxu0 0
    %1590 = vmatpush1.bf16.msra.mxu0 0
    %1591 = vmatprep.subr.bf16.mxu0 0
    %1592 = vmatpush1.bf16.msra.mxu0 0
    %1593 = vmatprep.subr.bf16.mxu0 0
    %1594 = vmatpush1.bf16.msra.mxu0 0
    %1595 = vmatprep.subr.bf16.mxu0 0
    %1596 = vmatpush1.bf16.msra.mxu0 0
    %1597 = vmatprep.subr.bf16.mxu0 0
    %1598 = vmatpush1.bf16.msra.mxu0 0
    %1599 = vmatprep.subr.bf16.mxu0 0
    %1600 = vmatpush1.bf16.msra.mxu0 0
    %1601 = vmatprep.subr.bf16.mxu0 0
    %1602 = vmatpush1.bf16.msra.mxu0 0
    %1603 = vmatprep.mubr.bf16.mxu0 0
    %1604 = vmatmul.mubr.bf16.gmra.mrb[0].mxu0 %v326
    %v1605 = vpop.f32.mrb[0].mxu0
    %v1606 = vadd.f32 %v1565, %v1605
    %v1607 = vpop.f32.mrb[0].mxu0
    %v1608 = vadd.f32 %v1567, %v1607
    %v1609 = vpop.f32.mrb[0].mxu0
    %v1610 = vpop.f32.mrb[0].mxu0
    %1611 = vdwg.mxu0
    %1612 = vmatprep.subr.bf16.mxu0 %v1053
    %1613 = vmatpush1.bf16.msra.mxu0 %v1052
    %1614 = vmatprep.subr.bf16.mxu0 %v1063
    %1615 = vmatpush1.bf16.msra.mxu0 %v1062
    %1616 = vmatprep.subr.bf16.mxu0 %v1073
    %1617 = vmatpush1.bf16.msra.mxu0 %v1072
    %1618 = vmatprep.subr.bf16.mxu0 %v1083
    %1619 = vmatpush1.bf16.msra.mxu0 %v1082
    %1620 = vmatprep.subr.bf16.mxu0 %v1093
    %1621 = vmatpush1.bf16.msra.mxu0 %v1092
    %1622 = vmatprep.subr.bf16.mxu0 %v1103
    %1623 = vmatpush1.bf16.msra.mxu0 %v1102
    %1624 = vmatprep.subr.bf16.mxu0 %v1113
    %1625 = vmatpush1.bf16.msra.mxu0 %v1112
    %1626 = vmatprep.subr.bf16.mxu0 %v1123
    %1627 = vmatpush1.bf16.msra.mxu0 %v1122
    %1628 = vmatprep.subr.bf16.mxu0 %v1133
    %1629 = vmatpush1.bf16.msra.mxu0 %v1132
    %1630 = vmatprep.subr.bf16.mxu0 %v1143
    %1631 = vmatpush1.bf16.msra.mxu0 %v1142
    %1632 = vmatprep.subr.bf16.mxu0 %v1153
    %1633 = vmatpush1.bf16.msra.mxu0 %v1152
    %1634 = vmatprep.subr.bf16.mxu0 %v1163
    %1635 = vmatpush1.bf16.msra.mxu0 %v1162
    %1636 = vmatprep.subr.bf16.mxu0 %v1173
    %1637 = vmatpush1.bf16.msra.mxu0 %v1172
    %1638 = vmatprep.subr.bf16.mxu0 %v1183
    %1639 = vmatpush1.bf16.msra.mxu0 %v1182
    %1640 = vmatprep.subr.bf16.mxu0 %v1193
    %1641 = vmatpush1.bf16.msra.mxu0 %v1192
    %1642 = vmatprep.subr.bf16.mxu0 %v1203
    %1643 = vmatpush1.bf16.msra.mxu0 %v1202
    %1644 = vmatprep.mubr.bf16.mxu0 %v325
    %1645 = vmatmul.mubr.bf16.gmra.mrb[0].mxu0 %v324
    %v1646 = vpop.f32.mrb[0].mxu0
    %v1647 = vadd.f32 0.0, %v1646
    %v1648 = vpop.f32.mrb[0].mxu0
    %v1649 = vadd.f32 0.0, %v1648
    %v1650 = vpop.f32.mrb[0].mxu0
    %v1651 = vpop.f32.mrb[0].mxu0
    %1652 = vdwg.mxu0
    %1653 = vmatprep.subr.bf16.mxu0 %v1213
    %1654 = vmatpush1.bf16.msra.mxu0 %v1212
    %1655 = vmatprep.subr.bf16.mxu0 %v1223
    %1656 = vmatpush1.bf16.msra.mxu0 %v1222
    %1657 = vmatprep.subr.bf16.mxu0 %v1233
    %1658 = vmatpush1.bf16.msra.mxu0 %v1232
    %1659 = vmatprep.subr.bf16.mxu0 %v1243
    %1660 = vmatpush1.bf16.msra.mxu0 %v1242
    %1661 = vmatprep.subr.bf16.mxu0 %v1253
    %1662 = vmatpush1.bf16.msra.mxu0 %v1252
    %1663 = vmatprep.subr.bf16.mxu0 %v1263
    %1664 = vmatpush1.bf16.msra.mxu0 %v1262
    %1665 = vmatprep.subr.bf16.mxu0 %v1273
    %1666 = vmatpush1.bf16.msra.mxu0 %v1272
    %1667 = vmatprep.subr.bf16.mxu0 %v1283
    %1668 = vmatpush1.bf16.msra.mxu0 %v1282
    %1669 = vmatprep.subr.bf16.mxu0 0
    %1670 = vmatpush1.bf16.msra.mxu0 0
    %1671 = vmatprep.subr.bf16.mxu0 0
    %1672 = vmatpush1.bf16.msra.mxu0 0
    %1673 = vmatprep.subr.bf16.mxu0 0
    %1674 = vmatpush1.bf16.msra.mxu0 0
    %1675 = vmatprep.subr.bf16.mxu0 0
    %1676 = vmatpush1.bf16.msra.mxu0 0
    %1677 = vmatprep.subr.bf16.mxu0 0
    %1678 = vmatpush1.bf16.msra.mxu0 0
    %1679 = vmatprep.subr.bf16.mxu0 0
    %1680 = vmatpush1.bf16.msra.mxu0 0
    %1681 = vmatprep.subr.bf16.mxu0 0
    %1682 = vmatpush1.bf16.msra.mxu0 0
    %1683 = vmatprep.subr.bf16.mxu0 0
    %1684 = vmatpush1.bf16.msra.mxu0 0
    %1685 = vmatprep.mubr.bf16.mxu0 0
    %1686 = vmatmul.mubr.bf16.gmra.mrb[0].mxu0 %v326
    %v1687 = vpop.f32.mrb[0].mxu0
    %v1688 = vadd.f32 %v1647, %v1687
    %v1689 = vpop.f32.mrb[0].mxu0
    %v1690 = vadd.f32 %v1649, %v1689
    %v1691 = vpop.f32.mrb[0].mxu0
    %v1692 = vpop.f32.mrb[0].mxu0
    %1693 = vdwg.mxu0
    %1694 = vmatprep.subr.bf16.mxu0 %v1055
    %1695 = vmatpush1.bf16.msra.mxu0 %v1054
    %1696 = vmatprep.subr.bf16.mxu0 %v1065
    %1697 = vmatpush1.bf16.msra.mxu0 %v1064
    %1698 = vmatprep.subr.bf16.mxu0 %v1075
    %1699 = vmatpush1.bf16.msra.mxu0 %v1074
    %1700 = vmatprep.subr.bf16.mxu0 %v1085
    %1701 = vmatpush1.bf16.msra.mxu0 %v1084
    %1702 = vmatprep.subr.bf16.mxu0 %v1095
    %1703 = vmatpush1.bf16.msra.mxu0 %v1094
    %1704 = vmatprep.subr.bf16.mxu0 %v1105
    %1705 = vmatpush1.bf16.msra.mxu0 %v1104
    %1706 = vmatprep.subr.bf16.mxu0 %v1115
    %1707 = vmatpush1.bf16.msra.mxu0 %v1114
    %1708 = vmatprep.subr.bf16.mxu0 %v1125
    %1709 = vmatpush1.bf16.msra.mxu0 %v1124
    %1710 = vmatprep.subr.bf16.mxu0 %v1135
    %1711 = vmatpush1.bf16.msra.mxu0 %v1134
    %1712 = vmatprep.subr.bf16.mxu0 %v1145
    %1713 = vmatpush1.bf16.msra.mxu0 %v1144
    %1714 = vmatprep.subr.bf16.mxu0 %v1155
    %1715 = vmatpush1.bf16.msra.mxu0 %v1154
    %1716 = vmatprep.subr.bf16.mxu0 %v1165
    %1717 = vmatpush1.bf16.msra.mxu0 %v1164
    %1718 = vmatprep.subr.bf16.mxu0 %v1175
    %1719 = vmatpush1.bf16.msra.mxu0 %v1174
    %1720 = vmatprep.subr.bf16.mxu0 %v1185
    %1721 = vmatpush1.bf16.msra.mxu0 %v1184
    %1722 = vmatprep.subr.bf16.mxu0 %v1195
    %1723 = vmatpush1.bf16.msra.mxu0 %v1194
    %1724 = vmatprep.subr.bf16.mxu0 %v1205
    %1725 = vmatpush1.bf16.msra.mxu0 %v1204
    %1726 = vmatprep.mubr.bf16.mxu0 %v325
    %1727 = vmatmul.mubr.bf16.gmra.mrb[0].mxu0 %v324
    %v1728 = vpop.f32.mrb[0].mxu0
    %v1729 = vadd.f32 0.0, %v1728
    %v1730 = vpop.f32.mrb[0].mxu0
    %v1731 = vadd.f32 0.0, %v1730
    %v1732 = vpop.f32.mrb[0].mxu0
    %v1733 = vpop.f32.mrb[0].mxu0
    %1734 = vdwg.mxu0
    %1735 = vmatprep.subr.bf16.mxu0 %v1215
    %1736 = vmatpush1.bf16.msra.mxu0 %v1214
    %1737 = vmatprep.subr.bf16.mxu0 %v1225
    %1738 = vmatpush1.bf16.msra.mxu0 %v1224
    %1739 = vmatprep.subr.bf16.mxu0 %v1235
    %1740 = vmatpush1.bf16.msra.mxu0 %v1234
    %1741 = vmatprep.subr.bf16.mxu0 %v1245
    %1742 = vmatpush1.bf16.msra.mxu0 %v1244
    %1743 = vmatprep.subr.bf16.mxu0 %v1255
    %1744 = vmatpush1.bf16.msra.mxu0 %v1254
    %1745 = vmatprep.subr.bf16.mxu0 %v1265
    %1746 = vmatpush1.bf16.msra.mxu0 %v1264
    %1747 = vmatprep.subr.bf16.mxu0 %v1275
    %1748 = vmatpush1.bf16.msra.mxu0 %v1274
    %1749 = vmatprep.subr.bf16.mxu0 %v1285
    %1750 = vmatpush1.bf16.msra.mxu0 %v1284
    %1751 = vmatprep.subr.bf16.mxu0 0
    %1752 = vmatpush1.bf16.msra.mxu0 0
    %1753 = vmatprep.subr.bf16.mxu0 0
    %1754 = vmatpush1.bf16.msra.mxu0 0
    %1755 = vmatprep.subr.bf16.mxu0 0
    %1756 = vmatpush1.bf16.msra.mxu0 0
    %1757 = vmatprep.subr.bf16.mxu0 0
    %1758 = vmatpush1.bf16.msra.mxu0 0
    %1759 = vmatprep.subr.bf16.mxu0 0
    %1760 = vmatpush1.bf16.msra.mxu0 0
    %1761 = vmatprep.subr.bf16.mxu0 0
    %1762 = vmatpush1.bf16.msra.mxu0 0
    %1763 = vmatprep.subr.bf16.mxu0 0
    %1764 = vmatpush1.bf16.msra.mxu0 0
    %1765 = vmatprep.subr.bf16.mxu0 0
    %1766 = vmatpush1.bf16.msra.mxu0 0
    %1767 = vmatprep.mubr.bf16.mxu0 0
    %1768 = vmatmul.mubr.bf16.gmra.mrb[0].mxu0 %v326
    %v1769 = vpop.f32.mrb[0].mxu0
    %v1770 = vadd.f32 %v1729, %v1769
    %v1771 = vpop.f32.mrb[0].mxu0
    %v1772 = vadd.f32 %v1731, %v1771
    %v1773 = vpop.f32.mrb[0].mxu0
    %v1774 = vpop.f32.mrb[0].mxu0
    %1775 = vdwg.mxu0
    %1776 = vmatprep.subr.bf16.mxu0 %v1057
    %1777 = vmatpush1.bf16.msra.mxu0 %v1056
    %1778 = vmatprep.subr.bf16.mxu0 %v1067
    %1779 = vmatpush1.bf16.msra.mxu0 %v1066
    %1780 = vmatprep.subr.bf16.mxu0 %v1077
    %1781 = vmatpush1.bf16.msra.mxu0 %v1076
    %1782 = vmatprep.subr.bf16.mxu0 %v1087
    %1783 = vmatpush1.bf16.msra.mxu0 %v1086
    %1784 = vmatprep.subr.bf16.mxu0 %v1097
    %1785 = vmatpush1.bf16.msra.mxu0 %v1096
    %1786 = vmatprep.subr.bf16.mxu0 %v1107
    %1787 = vmatpush1.bf16.msra.mxu0 %v1106
    %1788 = vmatprep.subr.bf16.mxu0 %v1117
    %1789 = vmatpush1.bf16.msra.mxu0 %v1116
    %1790 = vmatprep.subr.bf16.mxu0 %v1127
    %1791 = vmatpush1.bf16.msra.mxu0 %v1126
    %1792 = vmatprep.subr.bf16.mxu0 %v1137
    %1793 = vmatpush1.bf16.msra.mxu0 %v1136
    %1794 = vmatprep.subr.bf16.mxu0 %v1147
    %1795 = vmatpush1.bf16.msra.mxu0 %v1146
    %1796 = vmatprep.subr.bf16.mxu0 %v1157
    %1797 = vmatpush1.bf16.msra.mxu0 %v1156
    %1798 = vmatprep.subr.bf16.mxu0 %v1167
    %1799 = vmatpush1.bf16.msra.mxu0 %v1166
    %1800 = vmatprep.subr.bf16.mxu0 %v1177
    %1801 = vmatpush1.bf16.msra.mxu0 %v1176
    %1802 = vmatprep.subr.bf16.mxu0 %v1187
    %1803 = vmatpush1.bf16.msra.mxu0 %v1186
    %1804 = vmatprep.subr.bf16.mxu0 %v1197
    %1805 = vmatpush1.bf16.msra.mxu0 %v1196
    %1806 = vmatprep.subr.bf16.mxu0 %v1207
    %1807 = vmatpush1.bf16.msra.mxu0 %v1206
    %1808 = vmatprep.mubr.bf16.mxu0 %v325
    %1809 = vmatmul.mubr.bf16.gmra.mrb[0].mxu0 %v324
    %v1810 = vpop.f32.mrb[0].mxu0
    %v1811 = vadd.f32 0.0, %v1810
    %v1812 = vpop.f32.mrb[0].mxu0
    %v1813 = vadd.f32 0.0, %v1812
    %v1814 = vpop.f32.mrb[0].mxu0
    %v1815 = vpop.f32.mrb[0].mxu0
    %1816 = vdwg.mxu0
    %1817 = vmatprep.subr.bf16.mxu0 %v1217
    %1818 = vmatpush1.bf16.msra.mxu0 %v1216
    %1819 = vmatprep.subr.bf16.mxu0 %v1227
    %1820 = vmatpush1.bf16.msra.mxu0 %v1226
    %1821 = vmatprep.subr.bf16.mxu0 %v1237
    %1822 = vmatpush1.bf16.msra.mxu0 %v1236
    %1823 = vmatprep.subr.bf16.mxu0 %v1247
    %1824 = vmatpush1.bf16.msra.mxu0 %v1246
    %1825 = vmatprep.subr.bf16.mxu0 %v1257
    %1826 = vmatpush1.bf16.msra.mxu0 %v1256
    %1827 = vmatprep.subr.bf16.mxu0 %v1267
    %1828 = vmatpush1.bf16.msra.mxu0 %v1266
    %1829 = vmatprep.subr.bf16.mxu0 %v1277
    %1830 = vmatpush1.bf16.msra.mxu0 %v1276
    %1831 = vmatprep.subr.bf16.mxu0 %v1287
    %1832 = vmatpush1.bf16.msra.mxu0 %v1286
    %1833 = vmatprep.subr.bf16.mxu0 0
    %1834 = vmatpush1.bf16.msra.mxu0 0
    %1835 = vmatprep.subr.bf16.mxu0 0
    %1836 = vmatpush1.bf16.msra.mxu0 0
    %1837 = vmatprep.subr.bf16.mxu0 0
    %1838 = vmatpush1.bf16.msra.mxu0 0
    %1839 = vmatprep.subr.bf16.mxu0 0
    %1840 = vmatpush1.bf16.msra.mxu0 0
    %1841 = vmatprep.subr.bf16.mxu0 0
    %1842 = vmatpush1.bf16.msra.mxu0 0
    %1843 = vmatprep.subr.bf16.mxu0 0
    %1844 = vmatpush1.bf16.msra.mxu0 0
    %1845 = vmatprep.subr.bf16.mxu0 0
    %1846 = vmatpush1.bf16.msra.mxu0 0
    %1847 = vmatprep.subr.bf16.mxu0 0
    %1848 = vmatpush1.bf16.msra.mxu0 0
    %1849 = vmatprep.mubr.bf16.mxu0 0
    %1850 = vmatmul.mubr.bf16.gmra.mrb[0].mxu0 %v326
    %v1851 = vpop.f32.mrb[0].mxu0
    %v1852 = vadd.f32 %v1811, %v1851
    %v1853 = vpop.f32.mrb[0].mxu0
    %v1854 = vadd.f32 %v1813, %v1853
    %v1855 = vpop.f32.mrb[0].mxu0
    %v1856 = vpop.f32.mrb[0].mxu0
    %1857 = vdwg.mxu0
    %1858 = vmatprep.subr.bf16.mxu0 %v1059
    %1859 = vmatpush1.bf16.msra.mxu0 %v1058
    %1860 = vmatprep.subr.bf16.mxu0 %v1069
    %1861 = vmatpush1.bf16.msra.mxu0 %v1068
    %1862 = vmatprep.subr.bf16.mxu0 %v1079
    %1863 = vmatpush1.bf16.msra.mxu0 %v1078
    %1864 = vmatprep.subr.bf16.mxu0 %v1089
    %1865 = vmatpush1.bf16.msra.mxu0 %v1088
    %1866 = vmatprep.subr.bf16.mxu0 %v1099
    %1867 = vmatpush1.bf16.msra.mxu0 %v1098
    %1868 = vmatprep.subr.bf16.mxu0 %v1109
    %1869 = vmatpush1.bf16.msra.mxu0 %v1108
    %1870 = vmatprep.subr.bf16.mxu0 %v1119
    %1871 = vmatpush1.bf16.msra.mxu0 %v1118
    %1872 = vmatprep.subr.bf16.mxu0 %v1129
    %1873 = vmatpush1.bf16.msra.mxu0 %v1128
    %1874 = vmatprep.subr.bf16.mxu0 %v1139
    %1875 = vmatpush1.bf16.msra.mxu0 %v1138
    %1876 = vmatprep.subr.bf16.mxu0 %v1149
    %1877 = vmatpush1.bf16.msra.mxu0 %v1148
    %1878 = vmatprep.subr.bf16.mxu0 %v1159
    %1879 = vmatpush1.bf16.msra.mxu0 %v1158
    %1880 = vmatprep.subr.bf16.mxu0 %v1169
    %1881 = vmatpush1.bf16.msra.mxu0 %v1168
    %1882 = vmatprep.subr.bf16.mxu0 %v1179
    %1883 = vmatpush1.bf16.msra.mxu0 %v1178
    %1884 = vmatprep.subr.bf16.mxu0 %v1189
    %1885 = vmatpush1.bf16.msra.mxu0 %v1188
    %1886 = vmatprep.subr.bf16.mxu0 %v1199
    %1887 = vmatpush1.bf16.msra.mxu0 %v1198
    %1888 = vmatprep.subr.bf16.mxu0 %v1209
    %1889 = vmatpush1.bf16.msra.mxu0 %v1208
    %1890 = vmatprep.mubr.bf16.mxu0 %v325
    %1891 = vmatmul.mubr.bf16.gmra.mrb[0].mxu0 %v324
    %v1892 = vpop.f32.mrb[0].mxu0
    %v1893 = vadd.f32 0.0, %v1892
    %v1894 = vpop.f32.mrb[0].mxu0
    %v1895 = vadd.f32 0.0, %v1894
    %v1896 = vpop.f32.mrb[0].mxu0
    %v1897 = vpop.f32.mrb[0].mxu0
    %1898 = vdwg.mxu0
    %1899 = vmatprep.subr.bf16.mxu0 %v1219
    %1900 = vmatpush1.bf16.msra.mxu0 %v1218
    %1901 = vmatprep.subr.bf16.mxu0 %v1229
    %1902 = vmatpush1.bf16.msra.mxu0 %v1228
    %1903 = vmatprep.subr.bf16.mxu0 %v1239
    %1904 = vmatpush1.bf16.msra.mxu0 %v1238
    %1905 = vmatprep.subr.bf16.mxu0 %v1249
    %1906 = vmatpush1.bf16.msra.mxu0 %v1248
    %1907 = vmatprep.subr.bf16.mxu0 %v1259
    %1908 = vmatpush1.bf16.msra.mxu0 %v1258
    %1909 = vmatprep.subr.bf16.mxu0 %v1269
    %1910 = vmatpush1.bf16.msra.mxu0 %v1268
    %1911 = vmatprep.subr.bf16.mxu0 %v1279
    %1912 = vmatpush1.bf16.msra.mxu0 %v1278
    %1913 = vmatprep.subr.bf16.mxu0 %v1289
    %1914 = vmatpush1.bf16.msra.mxu0 %v1288
    %1915 = vmatprep.subr.bf16.mxu0 0
    %1916 = vmatpush1.bf16.msra.mxu0 0
    %1917 = vmatprep.subr.bf16.mxu0 0
    %1918 = vmatpush1.bf16.msra.mxu0 0
    %1919 = vmatprep.subr.bf16.mxu0 0
    %1920 = vmatpush1.bf16.msra.mxu0 0
    %1921 = vmatprep.subr.bf16.mxu0 0
    %1922 = vmatpush1.bf16.msra.mxu0 0
    %1923 = vmatprep.subr.bf16.mxu0 0
    %1924 = vmatpush1.bf16.msra.mxu0 0
    %1925 = vmatprep.subr.bf16.mxu0 0
    %1926 = vmatpush1.bf16.msra.mxu0 0
    %1927 = vmatprep.subr.bf16.mxu0 0
    %1928 = vmatpush1.bf16.msra.mxu0 0
    %1929 = vmatprep.subr.bf16.mxu0 0
    %1930 = vmatpush1.bf16.msra.mxu0 0
    %1931 = vmatprep.mubr.bf16.mxu0 0
    %1932 = vmatmul.mubr.bf16.gmra.mrb[0].mxu0 %v326
    %v1933 = vpop.f32.mrb[0].mxu0
    %v1934 = vadd.f32 %v1893, %v1933
    %v1935 = vpop.f32.mrb[0].mxu0
    %v1936 = vadd.f32 %v1895, %v1935
    %v1937 = vpop.f32.mrb[0].mxu0
    %v1938 = vpop.f32.mrb[0].mxu0
    %1939 = vdwg.mxu0
    %v1940 = vadd.f32 %v67, %v1606
    %v1941 = vadd.f32 %v68, %v1608
    %v1942 = vadd.f32 %v69, %v1688
    %v1943 = vadd.f32 %v70, %v1690
    %v1944 = vadd.f32 %v71, %v1770
    %v1945 = vadd.f32 %v72, %v1772
    %v1946 = vadd.f32 %v73, %v1852
    %v1947 = vadd.f32 %v74, %v1854
    %v1948 = vadd.f32 %v75, %v1934
    %v1949 = vadd.f32 %v76, %v1936
    %1950 = vst [vmem:[#allocation2] sm:$0xff] %v1940
    %1951 = vst [vmem:[#allocation2 + $0x8] sm:$0xff] %v1941
    %1952 = vst [vmem:[#allocation2 + $0x10] sm:$0xff] %v1942
    %1953 = vst [vmem:[#allocation2 + $0x18] sm:$0xff] %v1943
    %1954 = vst [vmem:[#allocation2 + $0x20] sm:$0xff] %v1944
    %1955 = vst [vmem:[#allocation2 + $0x28] sm:$0xff] %v1945
    %1956 = vst [vmem:[#allocation2 + $0x30] sm:$0xff] %v1946
    %1957 = vst [vmem:[#allocation2 + $0x38] sm:$0xff] %v1947
    %1958 = vst [vmem:[#allocation2 + $0x40] sm:$0xff] %v1948
    %1959 = vst [vmem:[#allocation2 + $0x48] sm:$0xff] %v1949
    // Predicated region
    $region30: #{tpu_custom_call.1} parent=1 // pred_check
      %p1960 = pneg %p53
    $region31: #{tpu_custom_call.1} parent=1 // pred_check_branch
      %1962 = sbr.rel (%p1960) target = $region33
    $region32: #{tpu_custom_call.1} parent=1 // pred_region
      %v1963 = vld [vmem:[#allocation2] sm:$0xff]
      %v1964 = vld [vmem:[#allocation2 + $0x8] sm:$0xff]
      %v1965 = vld [vmem:[#allocation2 + $0x10] sm:$0xff]
      %v1966 = vld [vmem:[#allocation2 + $0x18] sm:$0xff]
      %v1967 = vld [vmem:[#allocation2 + $0x20] sm:$0xff]
      %v1968 = vld [vmem:[#allocation2 + $0x28] sm:$0xff]
      %v1969 = vld [vmem:[#allocation2 + $0x30] sm:$0xff]
      %v1970 = vld [vmem:[#allocation2 + $0x38] sm:$0xff]
      %v1971 = vld [vmem:[#allocation2 + $0x40] sm:$0xff]
      %v1972 = vld [vmem:[#allocation2 + $0x48] sm:$0xff]
      %v1973 = vld [vmem:[#allocation8] sm:$0xff]
      %v1974 = vld [vmem:[#allocation8 + $0x8] sm:$0x3]
      %v1977 = vlaneseq
      %v1978 = vshrl.u32 %v1977, 7
      %v1979 = vsub.s32 0, %v1978
      %v1980 = vrot.slane %v1973, %v1979
      %v1981 = vlaneseq
      %v1982 = vshrl.u32 %v1981, 7
      %v1983 = vsub.s32 1, %v1982
      %v1984 = vrot.slane %v1973, %v1983
      %v1985 = vlaneseq
      %v1986 = vshrl.u32 %v1985, 7
      %v1987 = vsub.s32 2, %v1986
      %v1988 = vrot.slane %v1973, %v1987
      %v1989 = vlaneseq
      %v1990 = vshrl.u32 %v1989, 7
      %v1991 = vsub.s32 3, %v1990
      %v1992 = vrot.slane %v1973, %v1991
      %v1993 = vlaneseq
      %v1994 = vshrl.u32 %v1993, 7
      %v1995 = vsub.s32 4, %v1994
      %v1996 = vrot.slane %v1973, %v1995
      %v1997 = vlaneseq
      %v1998 = vshrl.u32 %v1997, 7
      %v1999 = vsub.s32 5, %v1998
      %v2000 = vrot.slane %v1973, %v1999
      %v2001 = vlaneseq
      %v2002 = vshrl.u32 %v2001, 7
      %v2003 = vsub.s32 6, %v2002
      %v2004 = vrot.slane %v1973, %v2003
      %v2005 = vlaneseq
      %v2006 = vshrl.u32 %v2005, 7
      %v2007 = vsub.s32 7, %v2006
      %v2008 = vrot.slane %v1973, %v2007
      %v2009 = vlaneseq
      %v2010 = vshrl.u32 %v2009, 7
      %v2011 = vsub.s32 0, %v2010
      %v2012 = vrot.slane %v1974, %v2011
      %v2013 = vlaneseq
      %v2014 = vshrl.u32 %v2013, 7
      %v2015 = vsub.s32 1, %v2014
      %v2016 = vrot.slane %v1974, %v2015
      %v2027 = vadd.f32 %v1963, %v1980
      %v2028 = vadd.f32 %v1964, %v1984
      %v2029 = vadd.f32 %v1965, %v1988
      %v2030 = vadd.f32 %v1966, %v1992
      %v2031 = vadd.f32 %v1967, %v1996
      %v2032 = vadd.f32 %v1968, %v2000
      %v2033 = vadd.f32 %v1969, %v2004
      %v2034 = vadd.f32 %v1970, %v2008
      %v2035 = vadd.f32 %v1971, %v2012
      %v2036 = vadd.f32 %v1972, %v2016
      %2037 = vst [vmem:[#allocation9] sm:$0xff] %v2027
      %2038 = vst [vmem:[#allocation9 + $0x8] sm:$0xff] %v2028
      %2039 = vst [vmem:[#allocation9 + $0x10] sm:$0xff] %v2029
      %2040 = vst [vmem:[#allocation9 + $0x18] sm:$0xff] %v2030
      %2041 = vst [vmem:[#allocation9 + $0x20] sm:$0xff] %v2031
      %2042 = vst [vmem:[#allocation9 + $0x28] sm:$0xff] %v2032
      %2043 = vst [vmem:[#allocation9 + $0x30] sm:$0xff] %v2033
      %2044 = vst [vmem:[#allocation9 + $0x38] sm:$0xff] %v2034
      %2045 = vst [vmem:[#allocation9 + $0x40] sm:$0xff] %v2035
      %2046 = vst [vmem:[#allocation9 + $0x48] sm:$0xff] %v2036
    $region33: #{tpu_custom_call.1} parent=1 // pred_fallthru
      _
    // Predicated region
    $region34: #{tpu_custom_call.1} parent=1 // pred_check
      _
    $region35: #{tpu_custom_call.1} parent=1 // pred_check_branch
      %2048 = sbr.rel (0) target = $region37
    $region36: #{tpu_custom_call.1} parent=1 // pred_region
      %s2050 = ssub.s32 1280, 1280
      %2051 = vsyncadd [#allocation5], %s2050
      %s2053 = sshll.u32 [#allocation9], 4
      %s2054 = int_to_ptr.vmem [resolvable:$true] %s2053
      %2056 = dma.vmem_to_hbm [thread:$0]  %s2054, 1280, %s3, [#allocation5]
    $region37: #{tpu_custom_call.1} parent=1 // pred_fallthru
      _
    // Predicated region
    $region38: #{tpu_custom_call.1} parent=1 // pred_check
      _
    $region39: #{tpu_custom_call.1} parent=1 // pred_check_branch
      %2058 = sbr.rel (0) target = $region41
    $region40: #{tpu_custom_call.1} parent=1 // pred_region
      %2059 = dma.done [#allocation5], 1280
    $region41: #{tpu_custom_call.1} parent=1 // pred_fallthru
      _
    %2060 = vsyncpa [#allocation4], 1
    %2061 = vsyncpa [#allocation7], 1
    %2062 = vsyncpa [#allocation5], 1

</llo_original>
